<compile_context>
chip_gen: v7x
topology: tpu7x:2x2x1
jax: 0.10.0
libtpu: 0.0.40
codegen_flags: <defaults>
</compile_context>

<pallas_src>
import numpy as np
import jax
import jax.numpy as jnp
from jax.experimental import pallas as pl
from jax.experimental.pallas import tpu as pltpu

# ---- problem dimensions (consistent with the module's state_dim dict) ----
WP = 10                      # state_dim['waypoints']
CV = 5                       # state_dim['companion_vehicle']
VEH = 2 * CV
LIGHT = 3                    # state_dim['light']
EGO = 6                      # state_dim['ego_vehicle']
ACT = 4                      # action_param_dim
NUM_ACTIONS = 3              # num_actions
HID = 64                     # encoder hidden size
ONE = WP + VEH + LIGHT       # one_state_dim = 23
STATE_DIM = 3 * ONE + EGO    # 75
BATCH = 2

ENC_W = 4 * HID              # 256 first-layer columns per encoder (lane|veh|light|ego)
ENC_COLS = 3 * ENC_W         # 768  (lane-aligned ReLU boundary)
EA_W = 2 * 32                # 64   [ego32 | act32] slab
H1_COLS = ENC_COLS + EA_W    # 832
NSC = 9                      # 3 folded score columns per encoder
OUT_PAD = 128                # lane-dense padded output width


# ------------------------------- kernel -------------------------------
def _qvalue_kernel(s_ref, a_ref, w1_ref, wact_ref, wsc_ref, wmid_ref,
                   bvec_ref, wout_ref, out_ref):
    s = s_ref[...]                                                   # (T, 75)
    a = a_ref[...]                                                   # (T, 4)

    # Fused first layer: all 12 encoder-branch linears + top-level ego
    # encoder live in W1 (75 x 832); their biases ride in bvec row 0.
    h1 = jnp.dot(s, w1_ref[...], preferred_element_type=jnp.float32) \
         + bvec_ref[0:1, :]                                          # (T, 832)

    # ReLU only the 12 encoder branch blocks (lane-aligned split at 768).
    henc = jnp.maximum(h1[:, :ENC_COLS], 0.0)                        # (T, 768)
    # Top-level ego/action encodings are linear; add the action matmul here.
    h_ea = h1[:, ENC_COLS:H1_COLS] \
           + jnp.dot(a, wact_ref[...], preferred_element_type=jnp.float32)  # (T, 64)

    # Attention scores for all 3 encoders, ego 'a' term folded into columns.
    sc = jnp.dot(henc, wsc_ref[...], preferred_element_type=jnp.float32) \
         + bvec_ref[1:2, :NSC]                                       # (T, 9)
    sc = jnp.where(sc >= 0.0, sc, 0.1 * sc)                          # LeakyReLU(0.1)

    # Per-encoder softmax + weighted mix of the first-layer hiddens.
    parts = []
    for e in range(3):
        g = sc[:, 3 * e:3 * e + 3]                                   # (T, 3)
        m = jnp.max(g, axis=-1, keepdims=True)
        ex = jnp.exp(g - m)
        den = jnp.sum(ex, axis=-1, keepdims=True)
        r = pl.reciprocal(den, approx=True)                          # EUP slot
        r = r * (2.0 - den * r)                                      # Newton -> f32 accurate
        sig = ex * r                                                 # softmax weights (T, 3)

        base = ENC_W * e
        mix = (sig[:, 0:1] * henc[:, base:base + HID]
               + sig[:, 1:2] * henc[:, base + HID:base + 2 * HID]
               + sig[:, 2:3] * henc[:, base + 2 * HID:base + 3 * HID])  # (T, 64)
        parts.append(mix)
    parts.append(h_ea)

    # Single K=256 matmul replaces the four K=64 partial matmuls.
    mixed = jnp.concatenate(parts, axis=-1)                          # (T, 256)
    acc = jnp.dot(mixed, wmid_ref[...], preferred_element_type=jnp.float32) \
          + bvec_ref[2:3, :256]                                      # (T, 256)

    hidden = jnp.maximum(acc, 0.0)
    out = jnp.dot(hidden, wout_ref[...], preferred_element_type=jnp.float32) \
          + bvec_ref[3:4, :OUT_PAD]                                  # (T, 128) lane-dense
    out_ref[...] = out


def _round_up(n, m):
    return (n + m - 1) // m * m


def _choose_tile(B):
    if B <= 8:
        return 8
    # >=2 grid steps so v7x's second TensorCore engages; cap at 512 rows to
    # amortize the ~0.35us per-grid-step overhead while staying tiny in VMEM.
    return min(512, _round_up((B + 1) // 2, 8))


def qvalue_multi_forward(state, action, packed):
    """state: (B, 75), action: (B, 4), packed: output of pack_params."""
    W1, Wact, Wsc, Wmid, bvec, Wout = packed
    B = state.shape[0]
    state = state.astype(jnp.float32)
    action = action.astype(jnp.float32)

    tile = _choose_tile(B)
    Bp = _round_up(B, tile)
    if Bp != B:
        state = jnp.pad(state, ((0, Bp - B), (0, 0)))
        action = jnp.pad(action, ((0, Bp - B), (0, 0)))
    grid = (Bp // tile,)

    out = pl.pallas_call(
        _qvalue_kernel,
        out_shape=jax.ShapeDtypeStruct((Bp, OUT_PAD), jnp.float32),
        grid=grid,
        in_specs=[
            pl.BlockSpec((tile, STATE_DIM), lambda i: (i, 0)),         # state (tiled)
            pl.BlockSpec((tile, ACT), lambda i: (i, 0)),               # action (tiled)
            pl.BlockSpec((STATE_DIM, H1_COLS), lambda i: (0, 0)),      # W1   (resident)
            pl.BlockSpec((ACT, EA_W), lambda i: (0, 0)),               # Wact (resident)
            pl.BlockSpec((ENC_COLS, NSC), lambda i: (0, 0)),           # Wsc  (resident)
            pl.BlockSpec((256, 256), lambda i: (0, 0)),                # Wmid (resident)
            pl.BlockSpec((4, H1_COLS), lambda i: (0, 0)),              # biases (resident)
            pl.BlockSpec((256, OUT_PAD), lambda i: (0, 0)),            # fc_out W (resident)
        ],
        out_specs=pl.BlockSpec((tile, OUT_PAD), lambda i: (i, 0)),
        compiler_params=pltpu.CompilerParams(
            dimension_semantics=("parallel",)),                        # v7x: 2 TCs split batch
    )(state, action, W1, Wact, Wsc, Wmid, bvec, Wout)
    return out[:B, :NUM_ACTIONS]


# --------------------------- parameter handling ---------------------------
def make_params(key):
    """Unpacked params in the (in_features, out_features) convention of a
    transposed torch.nn.Linear weight, stacked over the 3 encoders."""
    keys = iter(jax.random.split(key, 32))

    def init(shape, scale=0.1):
        return (scale * jax.random.normal(next(keys), shape)).astype(jnp.float32)

    E = 3
    return (
        init((E, WP, HID)),   init((E, HID)),        # lane_encoder   W, b
        init((E, VEH, HID)),  init((E, HID)),        # veh_encoder    W, b
        init((E, LIGHT, HID)), init((E, HID)),       # light_encoder  W, b
        init((E, EGO, HID)),  init((E, HID)),        # ego_encoder    W, b (inside attn enc)
        init((E, HID, HID)),  init((E, HID)),        # w              W, b
        init((E, HID)),       init((E, 1)),          # ego_a          W, b
        init((E, HID)),       init((E, 1)),          # ego_o          W, b
        init((EGO, 32)),      init((32,)),           # top-level ego_encoder
        init((ACT, 32)),      init((32,)),           # action_encoder
        init((256, 256)),     init((256,)),          # fc
        init((256, NUM_ACTIONS)), init((NUM_ACTIONS,)),  # fc_out
    )


def pack_params(params):
    """Host-side packing into 6 arrays (done in float64 numpy for exactness)."""
    p = [np.asarray(t, dtype=np.float64) for t in params]
    (wl, bl, wv, bv, wlt, blt, we, be, ww, bw, wa, ba, wo, bo,
     wge, bge, wae, bae, wfc, bfc, wout, bout) = p

    # --- block-diagonal first layer (state part) + its biases ---
    W1 = np.zeros((STATE_DIM, H1_COLS), np.float64)
    b1 = np.zeros((H1_COLS,), np.float64)
    for e in range(3):
        r = ONE * e
        c = ENC_W * e
        W1[r:r + WP,               c:c + HID]              = wl[e]
        W1[r + WP:r + WP + VEH,    c + HID:c + 2 * HID]    = wv[e]
        W1[r + WP + VEH:r + ONE,   c + 2 * HID:c + 3 * HID] = wlt[e]
        W1[3 * ONE:3 * ONE + EGO,  c + 3 * HID:c + 4 * HID] = we[e]
        b1[c:c + HID]               = bl[e]
        b1[c + HID:c + 2 * HID]     = bv[e]
        b1[c + 2 * HID:c + 3 * HID] = blt[e]
        b1[c + 3 * HID:c + 4 * HID] = be[e]
    W1[3 * ONE:3 * ONE + EGO, ENC_COLS:ENC_COLS + 32] = wge   # top-level ego encoder
    b1[ENC_COLS:ENC_COLS + 32] = bge
    b1[ENC_COLS + 32:ENC_COLS + 64] = bae                     # action-encoder bias

    # --- action encoder (only feeds the [ego32|act32] slab) ---
    Wact = np.zeros((ACT, EA_W), np.float64)
    Wact[:, 32:64] = wae

    # --- attention-score columns: ego_a/ego_o folded through `w`, 'a' term
    #     folded into every branch column ---
    Wsc = np.zeros((ENC_COLS, NSC), np.float64)
    bsc = np.zeros((NSC,), np.float64)
    for e in range(3):
        c = ENC_W * e
        wa_eff = ww[e] @ wa[e]
        wo_eff = ww[e] @ wo[e]
        ba_eff = bw[e] @ wa[e] + ba[e][0]
        bo_eff = bw[e] @ wo[e] + bo[e][0]
        for b in range(3):                               # 0=lane, 1=veh, 2=light
            col = 3 * e + b
            Wsc[c + b * HID:c + (b + 1) * HID, col] = wo_eff
            Wsc[c + 3 * HID:c + 4 * HID, col]       = wa_eff
            bsc[col] = ba_eff + bo_eff

    # --- second encoder layer folded into fc, flattened to one (256,256) ---
    Wmid = np.zeros((256, 256), np.float64)
    bmid = bfc.copy()
    for e in range(3):
        Wmid[HID * e:HID * (e + 1), :] = ww[e] @ wfc[HID * e:HID * (e + 1), :]
        bmid += bw[e] @ wfc[HID * e:HID * (e + 1), :]
    Wmid[3 * HID:4 * HID, :] = wfc[3 * HID:4 * HID, :]   # rows for [ego32 | act32]

    # --- lane-dense fc_out ---
    Wout = np.zeros((256, OUT_PAD), np.float64)
    Wout[:, :NUM_ACTIONS] = wout

    # --- one bias slab ---
    bvec = np.zeros((4, H1_COLS), np.float64)
    bvec[0, :] = b1
    bvec[1, :NSC] = bsc
    bvec[2, :256] = bmid
    bvec[3, :NUM_ACTIONS] = bout

    to_f32 = lambda a: jnp.asarray(a, dtype=jnp.float32)
    return (to_f32(W1), to_f32(Wact), to_f32(Wsc), to_f32(Wmid),
            to_f32(bvec), to_f32(Wout))


# ------------------------ plain-JAX reference (check) ------------------------
def reference_forward(state, action, params):
    (wl, bl, wv, bv, wlt, blt, we, be, ww, bw, wa, ba, wo, bo,
     wge, bge, wae, bae, wfc, bfc, wout, bout) = params
    PREC = jax.lax.Precision.HIGHEST
    ego_info = state[:, 3 * ONE:]

    def lin(x, w, b):
        return jnp.dot(x, w, precision=PREC) + b

    def encoder(e, lane_veh):
        lane = lane_veh[:, :WP]
        veh = lane_veh[:, WP:WP + VEH]
        light = lane_veh[:, WP + VEH:]
        ego_enc = lin(jax.nn.relu(lin(ego_info, we[e], be[e])), ww[e], bw[e])
        lane_enc = lin(jax.nn.relu(lin(lane, wl[e], bl[e])), ww[e], bw[e])
        veh_enc = lin(jax.nn.relu(lin(veh, wv[e], bv[e])), ww[e], bw[e])
        light_enc = lin(jax.nn.relu(lin(light, wlt[e], blt[e])), ww[e], bw[e])
        state_enc = jnp.stack([lane_enc, veh_enc, light_enc], axis=1)       # (B,3,H)
        a_ego = jnp.sum(ego_enc * wa[e], -1, keepdims=True) + ba[e]
        sc = jnp.concatenate(
            [jax.nn.leaky_relu(a_ego + jnp.sum(x * wo[e], -1, keepdims=True) + bo[e], 0.1)
             for x in (lane_enc, veh_enc, light_enc)], axis=1)              # (B,3)
        sm = jax.nn.softmax(sc, axis=1)[:, None, :]
        return jnp.matmul(sm, state_enc, precision=PREC).reshape(state.shape[0], HID)

    feat = jnp.concatenate(
        [encoder(0, state[:, :ONE]),
         encoder(1, state[:, ONE:2 * ONE]),
         encoder(2, state[:, 2 * ONE:3 * ONE]),
         lin(ego_info, wge, bge),
         lin(action, wae, bae)], axis=1)                                    # (B,256)
    hidden = jax.nn.relu(lin(feat, wfc, bfc))
    return lin(hidden, wout, bout)


if __name__ == "__main__":
    key = jax.random.PRNGKey(0)
    k_state, k_action, k_params = jax.random.split(key, 3)
    state = jax.random.normal(k_state, (BATCH, STATE_DIM), dtype=jnp.float32)
    action = jax.random.normal(k_action, (BATCH, ACT), dtype=jnp.float32)
    params = make_params(k_params)
    packed = pack_params(params)

    out = qvalue_multi_forward(state, action, packed)
    out = jax.block_until_ready(out)

    ref = reference_forward(state, action, params)
    assert out.shape == (BATCH, NUM_ACTIONS)
    assert jnp.allclose(out, ref, rtol=1e-3, atol=1e-3), (out, ref)

    print("KERNEL_OK")
</pallas_src>

<mosaic_0001>
module attributes {stable_mosaic.version = 11 : i64} {
  func.func @_qvalue_kernel(%arg0: i32, %arg1: memref<8x75xf32, #tpu.memory_space<vmem>>, %arg2: memref<8x4xf32, #tpu.memory_space<vmem>>, %arg3: memref<75x832xf32, #tpu.memory_space<vmem>>, %arg4: memref<4x64xf32, #tpu.memory_space<vmem>>, %arg5: memref<768x9xf32, #tpu.memory_space<vmem>>, %arg6: memref<256x256xf32, #tpu.memory_space<vmem>>, %arg7: memref<4x832xf32, #tpu.memory_space<vmem>>, %arg8: memref<256x128xf32, #tpu.memory_space<vmem>>, %arg9: memref<8x128xf32, #tpu.memory_space<vmem>>) attributes {dimension_semantics = [#tpu.dimension_semantics<parallel>], iteration_bounds = array<i64: 1>, scalar_prefetch = 0 : i64, scratch_operands = 0 : i64, tpu.core_type = #tpu.core_type<tc>, window_params = [{transform_indices = @transform_0, window_bounds = array<i64: 8, 75>}, {transform_indices = @transform_1, window_bounds = array<i64: 8, 4>}, {pipeline_mode = #tpu.pipeline_mode<synchronous>, transform_indices = @transform_2, window_bounds = array<i64: 75, 832>}, {pipeline_mode = #tpu.pipeline_mode<synchronous>, transform_indices = @transform_3, window_bounds = array<i64: 4, 64>}, {pipeline_mode = #tpu.pipeline_mode<synchronous>, transform_indices = @transform_4, window_bounds = array<i64: 768, 9>}, {pipeline_mode = #tpu.pipeline_mode<synchronous>, transform_indices = @transform_5, window_bounds = array<i64: 256, 256>}, {pipeline_mode = #tpu.pipeline_mode<synchronous>, transform_indices = @transform_6, window_bounds = array<i64: 4, 832>}, {pipeline_mode = #tpu.pipeline_mode<synchronous>, transform_indices = @transform_7, window_bounds = array<i64: 256, 128>}, {transform_indices = @transform_8, window_bounds = array<i64: 8, 128>}]} {
    %c0 = arith.constant 0 : index
    %c0_0 = arith.constant 0 : index
    %0 = vector.load %arg1[%c0, %c0_0] : memref<8x75xf32, #tpu.memory_space<vmem>>, vector<8x75xf32>
    %c0_1 = arith.constant 0 : index
    %c0_2 = arith.constant 0 : index
    %1 = vector.load %arg2[%c0_1, %c0_2] : memref<8x4xf32, #tpu.memory_space<vmem>>, vector<8x4xf32>
    %c0_3 = arith.constant 0 : index
    %c0_4 = arith.constant 0 : index
    %2 = vector.load %arg3[%c0_3, %c0_4] : memref<75x832xf32, #tpu.memory_space<vmem>>, vector<75x832xf32>
    %cst = arith.constant dense<0.000000e+00> : vector<8x832xf32>
    %3 = tpu.matmul %0, %2, %cst {dimension_numbers = #tpu.dot_dimension_numbers<[1], [0], [0], [1], [0, 0, 1, 1], [], []>} : vector<8x75xf32>, vector<75x832xf32>, vector<8x832xf32> -> vector<8x832xf32>
    %c0_5 = arith.constant 0 : index
    %c0_6 = arith.constant 0 : index
    %4 = vector.load %arg7[%c0_5, %c0_6] : memref<4x832xf32, #tpu.memory_space<vmem>>, vector<1x832xf32>
    %5 = vector.broadcast %4 : vector<1x832xf32> to vector<8x832xf32>
    %6 = arith.addf %3, %5 : vector<8x832xf32>
    %7 = vector.extract_strided_slice %6 {offsets = [0, 0], sizes = [8, 768], strides = [1, 1]} : vector<8x832xf32> to vector<8x768xf32>
    %cst_7 = arith.constant 0.000000e+00 : f32
    %8 = vector.broadcast %cst_7 : f32 to vector<8x768xf32>
    %9 = arith.maximumf %7, %8 : vector<8x768xf32>
    %10 = vector.extract_strided_slice %6 {offsets = [0, 768], sizes = [8, 64], strides = [1, 1]} : vector<8x832xf32> to vector<8x64xf32>
    %c0_8 = arith.constant 0 : index
    %c0_9 = arith.constant 0 : index
    %11 = vector.load %arg4[%c0_8, %c0_9] : memref<4x64xf32, #tpu.memory_space<vmem>>, vector<4x64xf32>
    %cst_10 = arith.constant dense<0.000000e+00> : vector<8x64xf32>
    %12 = tpu.matmul %1, %11, %cst_10 {dimension_numbers = #tpu.dot_dimension_numbers<[1], [0], [0], [1], [0, 0, 1, 1], [], []>} : vector<8x4xf32>, vector<4x64xf32>, vector<8x64xf32> -> vector<8x64xf32>
    %13 = arith.addf %10, %12 : vector<8x64xf32>
    %c0_11 = arith.constant 0 : index
    %c0_12 = arith.constant 0 : index
    %14 = vector.load %arg5[%c0_11, %c0_12] : memref<768x9xf32, #tpu.memory_space<vmem>>, vector<768x9xf32>
    %cst_13 = arith.constant dense<0.000000e+00> : vector<8x9xf32>
    %15 = tpu.matmul %9, %14, %cst_13 {dimension_numbers = #tpu.dot_dimension_numbers<[1], [0], [0], [1], [0, 0, 1, 1], [], []>} : vector<8x768xf32>, vector<768x9xf32>, vector<8x9xf32> -> vector<8x9xf32>
    %c1 = arith.constant 1 : index
    %c0_14 = arith.constant 0 : index
    %16 = vector.load %arg7[%c1, %c0_14] : memref<4x832xf32, #tpu.memory_space<vmem>>, vector<1x9xf32>
    %17 = vector.broadcast %16 : vector<1x9xf32> to vector<8x9xf32>
    %18 = arith.addf %15, %17 : vector<8x9xf32>
    %cst_15 = arith.constant 0.000000e+00 : f32
    %19 = vector.broadcast %cst_15 : f32 to vector<8x9xf32>
    %20 = arith.cmpf oge, %18, %19 : vector<8x9xf32>
    %cst_16 = arith.constant 1.000000e-01 : f32
    %21 = vector.broadcast %cst_16 : f32 to vector<8x9xf32>
    %22 = arith.mulf %21, %18 : vector<8x9xf32>
    %23 = arith.select %20, %18, %22 : vector<8x9xi1>, vector<8x9xf32>
    %24 = vector.extract_strided_slice %23 {offsets = [0, 0], sizes = [8, 3], strides = [1, 1]} : vector<8x9xf32> to vector<8x3xf32>
    %cst_17 = arith.constant dense<0xFF800000> : vector<8xf32>
    %25 = vector.multi_reduction <maximumf>, %24, %cst_17 [1] : vector<8x3xf32> to vector<8xf32>
    %26 = vector.shape_cast %25 : vector<8xf32> to vector<8x1xf32>
    %27 = vector.broadcast %26 : vector<8x1xf32> to vector<8x3xf32>
    %28 = arith.subf %24, %27 : vector<8x3xf32>
    %29 = math.exp %28 : vector<8x3xf32>
    %cst_18 = arith.constant dense<0.000000e+00> : vector<8xf32>
    %30 = vector.multi_reduction <add>, %29, %cst_18 [1] : vector<8x3xf32> to vector<8xf32>
    %31 = vector.shape_cast %30 : vector<8xf32> to vector<8x1xf32>
    %32 = tpu.reciprocal %31 {approx = true} : vector<8x1xf32> -> vector<8x1xf32>
    %33 = arith.mulf %31, %32 : vector<8x1xf32>
    %cst_19 = arith.constant 2.000000e+00 : f32
    %34 = vector.broadcast %cst_19 : f32 to vector<8x1xf32>
    %35 = arith.subf %34, %33 : vector<8x1xf32>
    %36 = arith.mulf %32, %35 : vector<8x1xf32>
    %37 = vector.broadcast %36 : vector<8x1xf32> to vector<8x3xf32>
    %38 = arith.mulf %29, %37 : vector<8x3xf32>
    %39 = vector.extract_strided_slice %38 {offsets = [0, 0], sizes = [8, 1], strides = [1, 1]} : vector<8x3xf32> to vector<8x1xf32>
    %40 = vector.extract_strided_slice %9 {offsets = [0, 0], sizes = [8, 64], strides = [1, 1]} : vector<8x768xf32> to vector<8x64xf32>
    %41 = vector.broadcast %39 : vector<8x1xf32> to vector<8x64xf32>
    %42 = arith.mulf %41, %40 : vector<8x64xf32>
    %43 = vector.extract_strided_slice %38 {offsets = [0, 1], sizes = [8, 1], strides = [1, 1]} : vector<8x3xf32> to vector<8x1xf32>
    %44 = vector.extract_strided_slice %9 {offsets = [0, 64], sizes = [8, 64], strides = [1, 1]} : vector<8x768xf32> to vector<8x64xf32>
    %45 = vector.broadcast %43 : vector<8x1xf32> to vector<8x64xf32>
    %46 = arith.mulf %45, %44 : vector<8x64xf32>
    %47 = arith.addf %42, %46 : vector<8x64xf32>
    %48 = vector.extract_strided_slice %38 {offsets = [0, 2], sizes = [8, 1], strides = [1, 1]} : vector<8x3xf32> to vector<8x1xf32>
    %49 = vector.extract_strided_slice %9 {offsets = [0, 128], sizes = [8, 64], strides = [1, 1]} : vector<8x768xf32> to vector<8x64xf32>
    %50 = vector.broadcast %48 : vector<8x1xf32> to vector<8x64xf32>
    %51 = arith.mulf %50, %49 : vector<8x64xf32>
    %52 = arith.addf %47, %51 : vector<8x64xf32>
    %53 = vector.extract_strided_slice %23 {offsets = [0, 3], sizes = [8, 3], strides = [1, 1]} : vector<8x9xf32> to vector<8x3xf32>
    %cst_20 = arith.constant dense<0xFF800000> : vector<8xf32>
    %54 = vector.multi_reduction <maximumf>, %53, %cst_20 [1] : vector<8x3xf32> to vector<8xf32>
    %55 = vector.shape_cast %54 : vector<8xf32> to vector<8x1xf32>
    %56 = vector.broadcast %55 : vector<8x1xf32> to vector<8x3xf32>
    %57 = arith.subf %53, %56 : vector<8x3xf32>
    %58 = math.exp %57 : vector<8x3xf32>
    %cst_21 = arith.constant dense<0.000000e+00> : vector<8xf32>
    %59 = vector.multi_reduction <add>, %58, %cst_21 [1] : vector<8x3xf32> to vector<8xf32>
    %60 = vector.shape_cast %59 : vector<8xf32> to vector<8x1xf32>
    %61 = tpu.reciprocal %60 {approx = true} : vector<8x1xf32> -> vector<8x1xf32>
    %62 = arith.mulf %60, %61 : vector<8x1xf32>
    %cst_22 = arith.constant 2.000000e+00 : f32
    %63 = vector.broadcast %cst_22 : f32 to vector<8x1xf32>
    %64 = arith.subf %63, %62 : vector<8x1xf32>
    %65 = arith.mulf %61, %64 : vector<8x1xf32>
    %66 = vector.broadcast %65 : vector<8x1xf32> to vector<8x3xf32>
    %67 = arith.mulf %58, %66 : vector<8x3xf32>
    %68 = vector.extract_strided_slice %67 {offsets = [0, 0], sizes = [8, 1], strides = [1, 1]} : vector<8x3xf32> to vector<8x1xf32>
    %69 = vector.extract_strided_slice %9 {offsets = [0, 256], sizes = [8, 64], strides = [1, 1]} : vector<8x768xf32> to vector<8x64xf32>
    %70 = vector.broadcast %68 : vector<8x1xf32> to vector<8x64xf32>
    %71 = arith.mulf %70, %69 : vector<8x64xf32>
    %72 = vector.extract_strided_slice %67 {offsets = [0, 1], sizes = [8, 1], strides = [1, 1]} : vector<8x3xf32> to vector<8x1xf32>
    %73 = vector.extract_strided_slice %9 {offsets = [0, 320], sizes = [8, 64], strides = [1, 1]} : vector<8x768xf32> to vector<8x64xf32>
    %74 = vector.broadcast %72 : vector<8x1xf32> to vector<8x64xf32>
    %75 = arith.mulf %74, %73 : vector<8x64xf32>
    %76 = arith.addf %71, %75 : vector<8x64xf32>
    %77 = vector.extract_strided_slice %67 {offsets = [0, 2], sizes = [8, 1], strides = [1, 1]} : vector<8x3xf32> to vector<8x1xf32>
    %78 = vector.extract_strided_slice %9 {offsets = [0, 384], sizes = [8, 64], strides = [1, 1]} : vector<8x768xf32> to vector<8x64xf32>
    %79 = vector.broadcast %77 : vector<8x1xf32> to vector<8x64xf32>
    %80 = arith.mulf %79, %78 : vector<8x64xf32>
    %81 = arith.addf %76, %80 : vector<8x64xf32>
    %82 = vector.extract_strided_slice %23 {offsets = [0, 6], sizes = [8, 3], strides = [1, 1]} : vector<8x9xf32> to vector<8x3xf32>
    %cst_23 = arith.constant dense<0xFF800000> : vector<8xf32>
    %83 = vector.multi_reduction <maximumf>, %82, %cst_23 [1] : vector<8x3xf32> to vector<8xf32>
    %84 = vector.shape_cast %83 : vector<8xf32> to vector<8x1xf32>
    %85 = vector.broadcast %84 : vector<8x1xf32> to vector<8x3xf32>
    %86 = arith.subf %82, %85 : vector<8x3xf32>
    %87 = math.exp %86 : vector<8x3xf32>
    %cst_24 = arith.constant dense<0.000000e+00> : vector<8xf32>
    %88 = vector.multi_reduction <add>, %87, %cst_24 [1] : vector<8x3xf32> to vector<8xf32>
    %89 = vector.shape_cast %88 : vector<8xf32> to vector<8x1xf32>
    %90 = tpu.reciprocal %89 {approx = true} : vector<8x1xf32> -> vector<8x1xf32>
    %91 = arith.mulf %89, %90 : vector<8x1xf32>
    %cst_25 = arith.constant 2.000000e+00 : f32
    %92 = vector.broadcast %cst_25 : f32 to vector<8x1xf32>
    %93 = arith.subf %92, %91 : vector<8x1xf32>
    %94 = arith.mulf %90, %93 : vector<8x1xf32>
    %95 = vector.broadcast %94 : vector<8x1xf32> to vector<8x3xf32>
    %96 = arith.mulf %87, %95 : vector<8x3xf32>
    %97 = vector.extract_strided_slice %96 {offsets = [0, 0], sizes = [8, 1], strides = [1, 1]} : vector<8x3xf32> to vector<8x1xf32>
    %98 = vector.extract_strided_slice %9 {offsets = [0, 512], sizes = [8, 64], strides = [1, 1]} : vector<8x768xf32> to vector<8x64xf32>
    %99 = vector.broadcast %97 : vector<8x1xf32> to vector<8x64xf32>
    %100 = arith.mulf %99, %98 : vector<8x64xf32>
    %101 = vector.extract_strided_slice %96 {offsets = [0, 1], sizes = [8, 1], strides = [1, 1]} : vector<8x3xf32> to vector<8x1xf32>
    %102 = vector.extract_strided_slice %9 {offsets = [0, 576], sizes = [8, 64], strides = [1, 1]} : vector<8x768xf32> to vector<8x64xf32>
    %103 = vector.broadcast %101 : vector<8x1xf32> to vector<8x64xf32>
    %104 = arith.mulf %103, %102 : vector<8x64xf32>
    %105 = arith.addf %100, %104 : vector<8x64xf32>
    %106 = vector.extract_strided_slice %96 {offsets = [0, 2], sizes = [8, 1], strides = [1, 1]} : vector<8x3xf32> to vector<8x1xf32>
    %107 = vector.extract_strided_slice %9 {offsets = [0, 640], sizes = [8, 64], strides = [1, 1]} : vector<8x768xf32> to vector<8x64xf32>
    %108 = vector.broadcast %106 : vector<8x1xf32> to vector<8x64xf32>
    %109 = arith.mulf %108, %107 : vector<8x64xf32>
    %110 = arith.addf %105, %109 : vector<8x64xf32>
    %111 = tpu.concatenate %52, %81, %110, %13 in 1 : vector<8x64xf32>, vector<8x64xf32>, vector<8x64xf32>, vector<8x64xf32> -> vector<8x256xf32>
    %c0_26 = arith.constant 0 : index
    %c0_27 = arith.constant 0 : index
    %112 = vector.load %arg6[%c0_26, %c0_27] : memref<256x256xf32, #tpu.memory_space<vmem>>, vector<256x256xf32>
    %cst_28 = arith.constant dense<0.000000e+00> : vector<8x256xf32>
    %113 = tpu.matmul %111, %112, %cst_28 {dimension_numbers = #tpu.dot_dimension_numbers<[1], [0], [0], [1], [0, 0, 1, 1], [], []>} : vector<8x256xf32>, vector<256x256xf32>, vector<8x256xf32> -> vector<8x256xf32>
    %c2 = arith.constant 2 : index
    %c0_29 = arith.constant 0 : index
    %114 = vector.load %arg7[%c2, %c0_29] : memref<4x832xf32, #tpu.memory_space<vmem>>, vector<1x256xf32>
    %115 = vector.broadcast %114 : vector<1x256xf32> to vector<8x256xf32>
    %116 = arith.addf %113, %115 : vector<8x256xf32>
    %cst_30 = arith.constant 0.000000e+00 : f32
    %117 = vector.broadcast %cst_30 : f32 to vector<8x256xf32>
    %118 = arith.maximumf %116, %117 : vector<8x256xf32>
    %c0_31 = arith.constant 0 : index
    %c0_32 = arith.constant 0 : index
    %119 = vector.load %arg8[%c0_31, %c0_32] : memref<256x128xf32, #tpu.memory_space<vmem>>, vector<256x128xf32>
    %cst_33 = arith.constant dense<0.000000e+00> : vector<8x128xf32>
    %120 = tpu.matmul %118, %119, %cst_33 {dimension_numbers = #tpu.dot_dimension_numbers<[1], [0], [0], [1], [0, 0, 1, 1], [], []>} : vector<8x256xf32>, vector<256x128xf32>, vector<8x128xf32> -> vector<8x128xf32>
    %c3 = arith.constant 3 : index
    %c0_34 = arith.constant 0 : index
    %121 = vector.load %arg7[%c3, %c0_34] : memref<4x832xf32, #tpu.memory_space<vmem>>, vector<1x128xf32>
    %122 = vector.broadcast %121 : vector<1x128xf32> to vector<8x128xf32>
    %123 = arith.addf %120, %122 : vector<8x128xf32>
    %c0_35 = arith.constant 0 : index
    %c0_36 = arith.constant 0 : index
    %124 = vector.load %arg9[%c0_35, %c0_36] : memref<8x128xf32, #tpu.memory_space<vmem>>, vector<8x128xf32>
    tpu.vector_store %arg9[%c0_35, %c0_36], %123 {strides = array<i32>} : memref<8x128xf32, #tpu.memory_space<vmem>>, vector<8x128xf32>,
    return
  }
  func.func @transform_0(%arg0: i32) -> (i32, i32) {
    %c0_i32 = arith.constant 0 : i32
    %c0_i32_0 = arith.constant 0 : i32
    return %arg0, %c0_i32 : i32, i32
  }
  func.func @transform_1(%arg0: i32) -> (i32, i32) {
    %c0_i32 = arith.constant 0 : i32
    %c0_i32_0 = arith.constant 0 : i32
    return %arg0, %c0_i32 : i32, i32
  }
  func.func @transform_2(%arg0: i32) -> (i32, i32) {
    %c0_i32 = arith.constant 0 : i32
    %c0_i32_0 = arith.constant 0 : i32
    %c0_i32_1 = arith.constant 0 : i32
    return %c0_i32, %c0_i32_0 : i32, i32
  }
  func.func @transform_3(%arg0: i32) -> (i32, i32) {
    %c0_i32 = arith.constant 0 : i32
    %c0_i32_0 = arith.constant 0 : i32
    %c0_i32_1 = arith.constant 0 : i32
    return %c0_i32, %c0_i32_0 : i32, i32
  }
  func.func @transform_4(%arg0: i32) -> (i32, i32) {
    %c0_i32 = arith.constant 0 : i32
    %c0_i32_0 = arith.constant 0 : i32
    %c0_i32_1 = arith.constant 0 : i32
    return %c0_i32, %c0_i32_0 : i32, i32
  }
  func.func @transform_5(%arg0: i32) -> (i32, i32) {
    %c0_i32 = arith.constant 0 : i32
    %c0_i32_0 = arith.constant 0 : i32
    %c0_i32_1 = arith.constant 0 : i32
    return %c0_i32, %c0_i32_0 : i32, i32
  }
  func.func @transform_6(%arg0: i32) -> (i32, i32) {
    %c0_i32 = arith.constant 0 : i32
    %c0_i32_0 = arith.constant 0 : i32
    %c0_i32_1 = arith.constant 0 : i32
    return %c0_i32, %c0_i32_0 : i32, i32
  }
  func.func @transform_7(%arg0: i32) -> (i32, i32) {
    %c0_i32 = arith.constant 0 : i32
    %c0_i32_0 = arith.constant 0 : i32
    %c0_i32_1 = arith.constant 0 : i32
    return %c0_i32, %c0_i32_0 : i32, i32
  }
  func.func @transform_8(%arg0: i32) -> (i32, i32) {
    %c0_i32 = arith.constant 0 : i32
    %c0_i32_0 = arith.constant 0 : i32
    return %arg0, %c0_i32 : i32, i32
  }
}

</mosaic_0001>

<llo_original>
// kernel: tpu_custom_call.1
$region0: #{tpu_custom_call.1}
  #allocation0 [shape = 'u32[]', space=smem, size = 0x4, offset = 0x4, fixed_abs, tag = 'smem constant byte address 0x4 - core index']
  #allocation1 [shape = 'u32[144,128]{1,0:T(1,128)}', space=vmem, size = 0x12000, scoped, tag = 'internal scratch']
  %s0 = inlined_call_operand.vmem [shape: f32[8,75], index: 0, kind: input, shape index: {}]
  %s1 = inlined_call_operand.vmem [shape: f32[8,4], index: 1, kind: input, shape index: {}]
  %s2 = inlined_call_operand.vmem [shape: f32[75,832], index: 2, kind: input, shape index: {}]
  %s3 = inlined_call_operand.vmem [shape: f32[4,64], index: 3, kind: input, shape index: {}]
  %s4 = inlined_call_operand.vmem [shape: f32[768,9], index: 4, kind: input, shape index: {}]
  %s5 = inlined_call_operand.hbm [shape: f32[256,256], index: 5, kind: input, shape index: {}]
  %s6 = inlined_call_operand.vmem [shape: f32[4,832], index: 6, kind: input, shape index: {}]
  %s7 = inlined_call_operand.vmem [shape: f32[256,128], index: 7, kind: input, shape index: {}]
  %s8 = inlined_call_operand.hbm [shape: f32[8,128], index: 8, kind: output, shape index: {}]
  %s9 = sld [smem:[#allocation0]]
  $region46: #{tpu_custom_call.1} parent=0
    _
  %s11 = ssub.s32 1, %s9
  %s12 = scalar_select 0, %s11, %s9
  $region1: #{tpu_custom_call.1} parent=0
    #allocation2 [shape = 'u8[262144]{0}', space=vmem, size = 0x40000, scoped, tag = 'input window, operand 5, single buffered']
    #allocation3 [shape = 's32[1]{0}', space=sflag, size = 0x4, scoped, tag = 'scoped memory for tpu_custom_call.1']
    #allocation4 [shape = 's32[1]{0}', space=sflag, size = 0x4, scoped, tag = 'scoped memory for tpu_custom_call.1']
    #allocation5 [shape = 'u8[4096]{0}', space=vmem, size = 0x1000, scoped, tag = 'output window, operand 0, single buffered']
    %13 = vsyncpa [#allocation3], 0
    %14 = vsyncpa [#allocation4], 0
    // Predicated region
    $region2: #{tpu_custom_call.1} parent=1 // pred_check
      _
    $region3: #{tpu_custom_call.1} parent=1 // pred_check_branch
      %16 = sbr.rel (0) target = $region5
    $region4: #{tpu_custom_call.1} parent=1 // pred_region
      _
    $region5: #{tpu_custom_call.1} parent=1 // pred_fallthru
      _
    // Predicated region
    $region6: #{tpu_custom_call.1} parent=1 // pred_check
      _
    $region7: #{tpu_custom_call.1} parent=1 // pred_check_branch
      %18 = sbr.rel (0) target = $region9
    $region8: #{tpu_custom_call.1} parent=1 // pred_region
      _
    $region9: #{tpu_custom_call.1} parent=1 // pred_fallthru
      _
    // Predicated region
    $region10: #{tpu_custom_call.1} parent=1 // pred_check
      _
    $region11: #{tpu_custom_call.1} parent=1 // pred_check_branch
      %20 = sbr.rel (0) target = $region13
    $region12: #{tpu_custom_call.1} parent=1 // pred_region
      _
    $region13: #{tpu_custom_call.1} parent=1 // pred_fallthru
      _
    // Predicated region
    $region14: #{tpu_custom_call.1} parent=1 // pred_check
      _
    $region15: #{tpu_custom_call.1} parent=1 // pred_check_branch
      %22 = sbr.rel (0) target = $region17
    $region16: #{tpu_custom_call.1} parent=1 // pred_region
      _
    $region17: #{tpu_custom_call.1} parent=1 // pred_fallthru
      _
    // Predicated region
    $region18: #{tpu_custom_call.1} parent=1 // pred_check
      _
    $region19: #{tpu_custom_call.1} parent=1 // pred_check_branch
      %24 = sbr.rel (0) target = $region21
    $region20: #{tpu_custom_call.1} parent=1 // pred_region
      _
    $region21: #{tpu_custom_call.1} parent=1 // pred_fallthru
      _
    // Predicated region
    $region22: #{tpu_custom_call.1} parent=1 // pred_check
      _
    $region23: #{tpu_custom_call.1} parent=1 // pred_check_branch
      %26 = sbr.rel (0) target = $region25
    $region24: #{tpu_custom_call.1} parent=1 // pred_region
      %s28 = ssub.s32 8192, 8192
      %29 = vsyncadd [#allocation3], %s28
      %s30 = sshll.u32 [#allocation2], 4
      %s31 = int_to_ptr.vmem [resolvable:$true] %s30
      %36 = dma.hbm_to_vmem [thread:$0]  %s5, 8192, %s31, [#allocation3], 256, 256, 16
    $region25: #{tpu_custom_call.1} parent=1 // pred_fallthru
      _
    // Predicated region
    $region26: #{tpu_custom_call.1} parent=1 // pred_check
      _
    $region27: #{tpu_custom_call.1} parent=1 // pred_check_branch
      %38 = sbr.rel (0) target = $region29
    $region28: #{tpu_custom_call.1} parent=1 // pred_region
      _
    $region29: #{tpu_custom_call.1} parent=1 // pred_fallthru
      _
    // Predicated region
    $region30: #{tpu_custom_call.1} parent=1 // pred_check
      _
    $region31: #{tpu_custom_call.1} parent=1 // pred_check_branch
      %40 = sbr.rel (0) target = $region33
    $region32: #{tpu_custom_call.1} parent=1 // pred_region
      _
    $region33: #{tpu_custom_call.1} parent=1 // pred_fallthru
      _
    // Predicated region
    $region34: #{tpu_custom_call.1} parent=1 // pred_check
      _
    $region35: #{tpu_custom_call.1} parent=1 // pred_check_branch
      %42 = sbr.rel (0) target = $region37
    $region36: #{tpu_custom_call.1} parent=1 // pred_region
      %43 = dma.done [#allocation3], 8192
    $region37: #{tpu_custom_call.1} parent=1 // pred_fallthru
      _
    %v44 = vld [vmem:[%s0] sm:$0xff]
    %v45 = vld [vmem:[%s1] sm:$0xff]
    %v46 = vld [vmem:[%s2] sm:$0xff]
    %v47 = vld [vmem:[%s2 + $0x8] sm:$0xff]
    %v48 = vld [vmem:[%s2 + $0x10] sm:$0xff]
    %v49 = vld [vmem:[%s2 + $0x18] sm:$0xff]
    %v50 = vld [vmem:[%s2 + $0x20] sm:$0xff]
    %v51 = vld [vmem:[%s2 + $0x28] sm:$0xff]
    %v52 = vld [vmem:[%s2 + $0x30] sm:$0xff]
    %v53 = vld [vmem:[%s2 + $0x38] sm:$0xff]
    %v54 = vld [vmem:[%s2 + $0x40] sm:$0xff]
    %v55 = vld [vmem:[%s2 + $0x48] sm:$0xff]
    %v56 = vld [vmem:[%s2 + $0x50] sm:$0xff]
    %v57 = vld [vmem:[%s2 + $0x58] sm:$0xff]
    %v58 = vld [vmem:[%s2 + $0x60] sm:$0xff]
    %v59 = vld [vmem:[%s2 + $0x68] sm:$0xff]
    %v60 = vld [vmem:[%s2 + $0x70] sm:$0xff]
    %v61 = vld [vmem:[%s2 + $0x78] sm:$0xff]
    %v62 = vld [vmem:[%s2 + $0x80] sm:$0xff]
    %v63 = vld [vmem:[%s2 + $0x88] sm:$0xff]
    %v64 = vld [vmem:[%s2 + $0x90] sm:$0xff]
    %v65 = vld [vmem:[%s2 + $0x98] sm:$0xff]
    %v66 = vld [vmem:[%s2 + $0xa0] sm:$0xff]
    %v67 = vld [vmem:[%s2 + $0xa8] sm:$0xff]
    %v68 = vld [vmem:[%s2 + $0xb0] sm:$0xff]
    %v69 = vld [vmem:[%s2 + $0xb8] sm:$0xff]
    %v70 = vld [vmem:[%s2 + $0xc0] sm:$0xff]
    %v71 = vld [vmem:[%s2 + $0xc8] sm:$0xff]
    %v72 = vld [vmem:[%s2 + $0xd0] sm:$0xff]
    %v73 = vld [vmem:[%s2 + $0xd8] sm:$0xff]
    %v74 = vld [vmem:[%s2 + $0xe0] sm:$0xff]
    %v75 = vld [vmem:[%s2 + $0xe8] sm:$0xff]
    %v76 = vld [vmem:[%s2 + $0xf0] sm:$0xff]
    %v77 = vld [vmem:[%s2 + $0xf8] sm:$0xff]
    %v78 = vld [vmem:[%s2 + $0x100] sm:$0xff]
    %v79 = vld [vmem:[%s2 + $0x108] sm:$0xff]
    %v80 = vld [vmem:[%s2 + $0x110] sm:$0xff]
    %v81 = vld [vmem:[%s2 + $0x118] sm:$0xff]
    %v82 = vld [vmem:[%s2 + $0x120] sm:$0xff]
    %v83 = vld [vmem:[%s2 + $0x128] sm:$0xff]
    %v84 = vld [vmem:[%s2 + $0x130] sm:$0xff]
    %v85 = vld [vmem:[%s2 + $0x138] sm:$0xff]
    %v86 = vld [vmem:[%s2 + $0x140] sm:$0xff]
    %v87 = vld [vmem:[%s2 + $0x148] sm:$0xff]
    %v88 = vld [vmem:[%s2 + $0x150] sm:$0xff]
    %v89 = vld [vmem:[%s2 + $0x158] sm:$0xff]
    %v90 = vld [vmem:[%s2 + $0x160] sm:$0xff]
    %v91 = vld [vmem:[%s2 + $0x168] sm:$0xff]
    %v92 = vld [vmem:[%s2 + $0x170] sm:$0xff]
    %v93 = vld [vmem:[%s2 + $0x178] sm:$0xff]
    %v94 = vld [vmem:[%s2 + $0x180] sm:$0xff]
    %v95 = vld [vmem:[%s2 + $0x188] sm:$0xff]
    %v96 = vld [vmem:[%s2 + $0x190] sm:$0xff]
    %v97 = vld [vmem:[%s2 + $0x198] sm:$0xff]
    %v98 = vld [vmem:[%s2 + $0x1a0] sm:$0xff]
    %v99 = vld [vmem:[%s2 + $0x1a8] sm:$0xff]
    %v100 = vld [vmem:[%s2 + $0x1b0] sm:$0xff]
    %v101 = vld [vmem:[%s2 + $0x1b8] sm:$0xff]
    %v102 = vld [vmem:[%s2 + $0x1c0] sm:$0xff]
    %v103 = vld [vmem:[%s2 + $0x1c8] sm:$0xff]
    %v104 = vld [vmem:[%s2 + $0x1d0] sm:$0xff]
    %v105 = vld [vmem:[%s2 + $0x1d8] sm:$0xff]
    %v106 = vld [vmem:[%s2 + $0x1e0] sm:$0xff]
    %v107 = vld [vmem:[%s2 + $0x1e8] sm:$0xff]
    %v108 = vld [vmem:[%s2 + $0x1f0] sm:$0xff]
    %v109 = vld [vmem:[%s2 + $0x1f8] sm:$0x7]
    %v110 = vld [vmem:[%s2 + $0x200] sm:$0x7]
    %v111 = vld [vmem:[%s2 + $0x208] sm:$0x7]
    %v112 = vld [vmem:[%s2 + $0x210] sm:$0x7]
    %v113 = vld [vmem:[%s2 + $0x218] sm:$0x7]
    %v114 = vld [vmem:[%s2 + $0x220] sm:$0x7]
    %v115 = vld [vmem:[%s2 + $0x228] sm:$0x7]
    %v116 = vld [vmem:[%s6] ss:$4 sm:$0x7f]
    %v118 = vlaneseq
    %v119 = vshrl.u32 %v118, 7
    %v120 = vsub.s32 0, %v119
    %v121 = vrot.slane %v116, %v120
    %v122 = vlaneseq
    %v123 = vshrl.u32 %v122, 7
    %v124 = vsub.s32 1, %v123
    %v125 = vrot.slane %v116, %v124
    %v126 = vlaneseq
    %v127 = vshrl.u32 %v126, 7
    %v128 = vsub.s32 2, %v127
    %v129 = vrot.slane %v116, %v128
    %v130 = vlaneseq
    %v131 = vshrl.u32 %v130, 7
    %v132 = vsub.s32 3, %v131
    %v133 = vrot.slane %v116, %v132
    %v134 = vlaneseq
    %v135 = vshrl.u32 %v134, 7
    %v136 = vsub.s32 4, %v135
    %v137 = vrot.slane %v116, %v136
    %v138 = vlaneseq
    %v139 = vshrl.u32 %v138, 7
    %v140 = vsub.s32 5, %v139
    %v141 = vrot.slane %v116, %v140
    %v142 = vlaneseq
    %v143 = vshrl.u32 %v142, 7
    %v144 = vsub.s32 6, %v143
    %v145 = vrot.slane %v116, %v144
    %vm153 = vcmask 613376
    %v155 = vsel %vm153, %v44, 0
    %vm157 = vcmask 1042432
    %v159 = vsel %vm157, %v109, 0
    %v162 = vsel %vm157, %v110, 0
    %v165 = vsel %vm157, %v111, 0
    %v168 = vsel %vm157, %v112, 0
    %v171 = vsel %vm157, %v113, 0
    %v174 = vsel %vm157, %v114, 0
    %v177 = vsel %vm157, %v115, 0
    %179 = vmatprep.subr.mxu0 %v47
    %180 = vmatpush1.msra.mxu0 %v46
    %181 = vmatprep.subr.mxu0 %v54
    %182 = vmatpush1.msra.mxu0 %v53
    %183 = vmatprep.subr.mxu0 %v61
    %184 = vmatpush1.msra.mxu0 %v60
    %185 = vmatprep.subr.mxu0 %v68
    %186 = vmatpush1.msra.mxu0 %v67
    %187 = vmatprep.subr.mxu0 %v75
    %188 = vmatpush1.msra.mxu0 %v74
    %189 = vmatprep.subr.mxu0 %v82
    %190 = vmatpush1.msra.mxu0 %v81
    %191 = vmatprep.subr.mxu0 %v89
    %192 = vmatpush1.msra.mxu0 %v88
    %193 = vmatprep.subr.mxu0 %v96
    %194 = vmatpush1.msra.mxu0 %v95
    %195 = vmatprep.subr.mxu0 %v103
    %196 = vmatpush1.msra.mxu0 %v102
    %197 = vmatprep.subr.mxu0 %v162
    %198 = vmatpush1.msra.mxu0 %v159
    %199 = vmatprep.subr.mxu0 0.0
    %200 = vmatpush1.msra.mxu0 0.0
    %201 = vmatprep.subr.mxu0 0.0
    %202 = vmatpush1.msra.mxu0 0.0
    %203 = vmatprep.subr.mxu0 0.0
    %204 = vmatpush1.msra.mxu0 0.0
    %205 = vmatprep.subr.mxu0 0.0
    %206 = vmatpush1.msra.mxu0 0.0
    %207 = vmatprep.subr.mxu0 0.0
    %208 = vmatpush1.msra.mxu0 0.0
    %209 = vmatprep.subr.mxu0 0.0
    %210 = vmatpush1.msra.mxu0 0.0
    %211 = vmatprep.subr.mxu0 0.0
    %212 = vmatpush1.msra.mxu0 0.0
    %213 = vmatprep.subr.mxu0 0.0
    %214 = vmatpush1.msra.mxu0 0.0
    %215 = vmatprep.subr.mxu0 0.0
    %216 = vmatpush1.msra.mxu0 0.0
    %217 = vmatprep.subr.mxu0 0.0
    %218 = vmatpush1.msra.mxu0 0.0
    %219 = vmatprep.subr.mxu0 0.0
    %220 = vmatpush1.msra.mxu0 0.0
    %221 = vmatprep.subr.mxu0 0.0
    %222 = vmatpush1.msra.mxu0 0.0
    %223 = vmatprep.subr.mxu0 0.0
    %224 = vmatpush1.msra.mxu0 0.0
    %225 = vmatprep.subr.mxu0 0.0
    %226 = vmatpush1.msra.mxu0 0.0
    %227 = vmatprep.subr.mxu0 0.0
    %228 = vmatpush1.msra.mxu0 0.0
    %229 = vmatprep.subr.mxu0 0.0
    %230 = vmatpush1.msra.mxu0 0.0
    %231 = vmatprep.subr.mxu0 0.0
    %232 = vmatpush1.msra.mxu0 0.0
    %233 = vmatprep.subr.mxu0 0.0
    %234 = vmatpush1.msra.mxu0 0.0
    %235 = vmatprep.subr.mxu0 0.0
    %236 = vmatpush1.msra.mxu0 0.0
    %237 = vmatprep.subr.mxu0 0.0
    %238 = vmatpush1.msra.mxu0 0.0
    %239 = vmatprep.subr.mxu0 0.0
    %240 = vmatpush1.msra.mxu0 0.0
    %241 = vmatprep.subr.mxu0 0.0
    %242 = vmatpush1.msra.mxu0 0.0
    %243 = vmatprep.mubr.f32.mxu0 0.0
    %244 = vmatmul.mubr.f32.gmra.mrb[0].mxu0 %v155
    %v245 = vpop.f32.mrb[0].mxu0
    %v246 = vadd.f32 %v121, %v245
    %v247 = vpop.f32.mrb[0].mxu0
    %v248 = vadd.f32 %v125, %v247
    %249 = vdwg.mxu0
    %250 = vmatprep.subr.mxu0 %v49
    %251 = vmatpush1.msra.mxu0 %v48
    %252 = vmatprep.subr.mxu0 %v56
    %253 = vmatpush1.msra.mxu0 %v55
    %254 = vmatprep.subr.mxu0 %v63
    %255 = vmatpush1.msra.mxu0 %v62
    %256 = vmatprep.subr.mxu0 %v70
    %257 = vmatpush1.msra.mxu0 %v69
    %258 = vmatprep.subr.mxu0 %v77
    %259 = vmatpush1.msra.mxu0 %v76
    %260 = vmatprep.subr.mxu0 %v84
    %261 = vmatpush1.msra.mxu0 %v83
    %262 = vmatprep.subr.mxu0 %v91
    %263 = vmatpush1.msra.mxu0 %v90
    %264 = vmatprep.subr.mxu0 %v98
    %265 = vmatpush1.msra.mxu0 %v97
    %266 = vmatprep.subr.mxu0 %v105
    %267 = vmatpush1.msra.mxu0 %v104
    %268 = vmatprep.subr.mxu0 %v168
    %269 = vmatpush1.msra.mxu0 %v165
    %270 = vmatprep.subr.mxu0 0.0
    %271 = vmatpush1.msra.mxu0 0.0
    %272 = vmatprep.subr.mxu0 0.0
    %273 = vmatpush1.msra.mxu0 0.0
    %274 = vmatprep.subr.mxu0 0.0
    %275 = vmatpush1.msra.mxu0 0.0
    %276 = vmatprep.subr.mxu0 0.0
    %277 = vmatpush1.msra.mxu0 0.0
    %278 = vmatprep.subr.mxu0 0.0
    %279 = vmatpush1.msra.mxu0 0.0
    %280 = vmatprep.subr.mxu0 0.0
    %281 = vmatpush1.msra.mxu0 0.0
    %282 = vmatprep.subr.mxu0 0.0
    %283 = vmatpush1.msra.mxu0 0.0
    %284 = vmatprep.subr.mxu0 0.0
    %285 = vmatpush1.msra.mxu0 0.0
    %286 = vmatprep.subr.mxu0 0.0
    %287 = vmatpush1.msra.mxu0 0.0
    %288 = vmatprep.subr.mxu0 0.0
    %289 = vmatpush1.msra.mxu0 0.0
    %290 = vmatprep.subr.mxu0 0.0
    %291 = vmatpush1.msra.mxu0 0.0
    %292 = vmatprep.subr.mxu0 0.0
    %293 = vmatpush1.msra.mxu0 0.0
    %294 = vmatprep.subr.mxu0 0.0
    %295 = vmatpush1.msra.mxu0 0.0
    %296 = vmatprep.subr.mxu0 0.0
    %297 = vmatpush1.msra.mxu0 0.0
    %298 = vmatprep.subr.mxu0 0.0
    %299 = vmatpush1.msra.mxu0 0.0
    %300 = vmatprep.subr.mxu0 0.0
    %301 = vmatpush1.msra.mxu0 0.0
    %302 = vmatprep.subr.mxu0 0.0
    %303 = vmatpush1.msra.mxu0 0.0
    %304 = vmatprep.subr.mxu0 0.0
    %305 = vmatpush1.msra.mxu0 0.0
    %306 = vmatprep.subr.mxu0 0.0
    %307 = vmatpush1.msra.mxu0 0.0
    %308 = vmatprep.subr.mxu0 0.0
    %309 = vmatpush1.msra.mxu0 0.0
    %310 = vmatprep.subr.mxu0 0.0
    %311 = vmatpush1.msra.mxu0 0.0
    %312 = vmatprep.subr.mxu0 0.0
    %313 = vmatpush1.msra.mxu0 0.0
    %314 = vmatprep.mubr.f32.mxu0 0.0
    %315 = vmatmul.mubr.f32.gmra.mrb[0].mxu0 %v155
    %v316 = vpop.f32.mrb[0].mxu0
    %v317 = vadd.f32 %v129, %v316
    %v318 = vpop.f32.mrb[0].mxu0
    %v319 = vadd.f32 %v133, %v318
    %320 = vdwg.mxu0
    %321 = vmatprep.subr.mxu0 %v51
    %322 = vmatpush1.msra.mxu0 %v50
    %323 = vmatprep.subr.mxu0 %v58
    %324 = vmatpush1.msra.mxu0 %v57
    %325 = vmatprep.subr.mxu0 %v65
    %326 = vmatpush1.msra.mxu0 %v64
    %327 = vmatprep.subr.mxu0 %v72
    %328 = vmatpush1.msra.mxu0 %v71
    %329 = vmatprep.subr.mxu0 %v79
    %330 = vmatpush1.msra.mxu0 %v78
    %331 = vmatprep.subr.mxu0 %v86
    %332 = vmatpush1.msra.mxu0 %v85
    %333 = vmatprep.subr.mxu0 %v93
    %334 = vmatpush1.msra.mxu0 %v92
    %335 = vmatprep.subr.mxu0 %v100
    %336 = vmatpush1.msra.mxu0 %v99
    %337 = vmatprep.subr.mxu0 %v107
    %338 = vmatpush1.msra.mxu0 %v106
    %339 = vmatprep.subr.mxu0 %v174
    %340 = vmatpush1.msra.mxu0 %v171
    %341 = vmatprep.subr.mxu0 0.0
    %342 = vmatpush1.msra.mxu0 0.0
    %343 = vmatprep.subr.mxu0 0.0
    %344 = vmatpush1.msra.mxu0 0.0
    %345 = vmatprep.subr.mxu0 0.0
    %346 = vmatpush1.msra.mxu0 0.0
    %347 = vmatprep.subr.mxu0 0.0
    %348 = vmatpush1.msra.mxu0 0.0
    %349 = vmatprep.subr.mxu0 0.0
    %350 = vmatpush1.msra.mxu0 0.0
    %351 = vmatprep.subr.mxu0 0.0
    %352 = vmatpush1.msra.mxu0 0.0
    %353 = vmatprep.subr.mxu0 0.0
    %354 = vmatpush1.msra.mxu0 0.0
    %355 = vmatprep.subr.mxu0 0.0
    %356 = vmatpush1.msra.mxu0 0.0
    %357 = vmatprep.subr.mxu0 0.0
    %358 = vmatpush1.msra.mxu0 0.0
    %359 = vmatprep.subr.mxu0 0.0
    %360 = vmatpush1.msra.mxu0 0.0
    %361 = vmatprep.subr.mxu0 0.0
    %362 = vmatpush1.msra.mxu0 0.0
    %363 = vmatprep.subr.mxu0 0.0
    %364 = vmatpush1.msra.mxu0 0.0
    %365 = vmatprep.subr.mxu0 0.0
    %366 = vmatpush1.msra.mxu0 0.0
    %367 = vmatprep.subr.mxu0 0.0
    %368 = vmatpush1.msra.mxu0 0.0
    %369 = vmatprep.subr.mxu0 0.0
    %370 = vmatpush1.msra.mxu0 0.0
    %371 = vmatprep.subr.mxu0 0.0
    %372 = vmatpush1.msra.mxu0 0.0
    %373 = vmatprep.subr.mxu0 0.0
    %374 = vmatpush1.msra.mxu0 0.0
    %375 = vmatprep.subr.mxu0 0.0
    %376 = vmatpush1.msra.mxu0 0.0
    %377 = vmatprep.subr.mxu0 0.0
    %378 = vmatpush1.msra.mxu0 0.0
    %379 = vmatprep.subr.mxu0 0.0
    %380 = vmatpush1.msra.mxu0 0.0
    %381 = vmatprep.subr.mxu0 0.0
    %382 = vmatpush1.msra.mxu0 0.0
    %383 = vmatprep.subr.mxu0 0.0
    %384 = vmatpush1.msra.mxu0 0.0
    %385 = vmatprep.mubr.f32.mxu0 0.0
    %386 = vmatmul.mubr.f32.gmra.mrb[0].mxu0 %v155
    %v387 = vpop.f32.mrb[0].mxu0
    %v388 = vadd.f32 %v137, %v387
    %v389 = vpop.f32.mrb[0].mxu0
    %v390 = vadd.f32 %v141, %v389
    %391 = vdwg.mxu0
    %392 = vmatprep.subr.mxu0 0.0
    %393 = vmatpush1.msra.mxu0 %v52
    %394 = vmatprep.subr.mxu0 0.0
    %395 = vmatpush1.msra.mxu0 %v59
    %396 = vmatprep.subr.mxu0 0.0
    %397 = vmatpush1.msra.mxu0 %v66
    %398 = vmatprep.subr.mxu0 0.0
    %399 = vmatpush1.msra.mxu0 %v73
    %400 = vmatprep.subr.mxu0 0.0
    %401 = vmatpush1.msra.mxu0 %v80
    %402 = vmatprep.subr.mxu0 0.0
    %403 = vmatpush1.msra.mxu0 %v87
    %404 = vmatprep.subr.mxu0 0.0
    %405 = vmatpush1.msra.mxu0 %v94
    %406 = vmatprep.subr.mxu0 0.0
    %407 = vmatpush1.msra.mxu0 %v101
    %408 = vmatprep.subr.mxu0 0.0
    %409 = vmatpush1.msra.mxu0 %v108
    %410 = vmatprep.subr.mxu0 0.0
    %411 = vmatpush1.msra.mxu0 %v177
    %412 = vmatprep.subr.mxu0 0.0
    %413 = vmatpush1.msra.mxu0 0.0
    %414 = vmatprep.subr.mxu0 0.0
    %415 = vmatpush1.msra.mxu0 0.0
    %416 = vmatprep.subr.mxu0 0.0
    %417 = vmatpush1.msra.mxu0 0.0
    %418 = vmatprep.subr.mxu0 0.0
    %419 = vmatpush1.msra.mxu0 0.0
    %420 = vmatprep.subr.mxu0 0.0
    %421 = vmatpush1.msra.mxu0 0.0
    %422 = vmatprep.subr.mxu0 0.0
    %423 = vmatpush1.msra.mxu0 0.0
    %424 = vmatprep.subr.mxu0 0.0
    %425 = vmatpush1.msra.mxu0 0.0
    %426 = vmatprep.subr.mxu0 0.0
    %427 = vmatpush1.msra.mxu0 0.0
    %428 = vmatprep.subr.mxu0 0.0
    %429 = vmatpush1.msra.mxu0 0.0
    %430 = vmatprep.subr.mxu0 0.0
    %431 = vmatpush1.msra.mxu0 0.0
    %432 = vmatprep.subr.mxu0 0.0
    %433 = vmatpush1.msra.mxu0 0.0
    %434 = vmatprep.subr.mxu0 0.0
    %435 = vmatpush1.msra.mxu0 0.0
    %436 = vmatprep.subr.mxu0 0.0
    %437 = vmatpush1.msra.mxu0 0.0
    %438 = vmatprep.subr.mxu0 0.0
    %439 = vmatpush1.msra.mxu0 0.0
    %440 = vmatprep.subr.mxu0 0.0
    %441 = vmatpush1.msra.mxu0 0.0
    %442 = vmatprep.subr.mxu0 0.0
    %443 = vmatpush1.msra.mxu0 0.0
    %444 = vmatprep.subr.mxu0 0.0
    %445 = vmatpush1.msra.mxu0 0.0
    %446 = vmatprep.subr.mxu0 0.0
    %447 = vmatpush1.msra.mxu0 0.0
    %448 = vmatprep.subr.mxu0 0.0
    %449 = vmatpush1.msra.mxu0 0.0
    %450 = vmatprep.subr.mxu0 0.0
    %451 = vmatpush1.msra.mxu0 0.0
    %452 = vmatprep.subr.mxu0 0.0
    %453 = vmatpush1.msra.mxu0 0.0
    %454 = vmatprep.subr.mxu0 0.0
    %455 = vmatpush1.msra.mxu0 0.0
    %456 = vmatprep.mubr.f32.mxu0 0.0
    %457 = vmatmul.mubr.f32.gmra.mrb[0].mxu0 %v155
    %v458 = vpop.f32.mrb[0].mxu0
    %v459 = vadd.f32 %v145, %v458
    %v460 = vpop.f32.mrb[0].mxu0
    %461 = vdwg.mxu0
    %v462 = vmax.f32 %v246, 0.0
    %v463 = vmax.f32 %v248, 0.0
    %v464 = vmax.f32 %v317, 0.0
    %v465 = vmax.f32 %v319, 0.0
    %v466 = vmax.f32 %v388, 0.0
    %v467 = vmax.f32 %v390, 0.0
    %v468 = vld [vmem:[%s3] sm:$0xf]
    %vm469 = vcmask 31744
    %v471 = vsel %vm469, %v45, 0
    %vm473 = vcmask 1043456
    %v475 = vsel %vm473, %v468, 0
    %477 = vmatprep.subr.mxu0 0.0
    %478 = vmatpush1.msra.mxu0 %v475
    %479 = vmatprep.subr.mxu0 0.0
    %480 = vmatpush1.msra.mxu0 0.0
    %481 = vmatprep.subr.mxu0 0.0
    %482 = vmatpush1.msra.mxu0 0.0
    %483 = vmatprep.subr.mxu0 0.0
    %484 = vmatpush1.msra.mxu0 0.0
    %485 = vmatprep.subr.mxu0 0.0
    %486 = vmatpush1.msra.mxu0 0.0
    %487 = vmatprep.subr.mxu0 0.0
    %488 = vmatpush1.msra.mxu0 0.0
    %489 = vmatprep.subr.mxu0 0.0
    %490 = vmatpush1.msra.mxu0 0.0
    %491 = vmatprep.subr.mxu0 0.0
    %492 = vmatpush1.msra.mxu0 0.0
    %493 = vmatprep.subr.mxu0 0.0
    %494 = vmatpush1.msra.mxu0 0.0
    %495 = vmatprep.subr.mxu0 0.0
    %496 = vmatpush1.msra.mxu0 0.0
    %497 = vmatprep.subr.mxu0 0.0
    %498 = vmatpush1.msra.mxu0 0.0
    %499 = vmatprep.subr.mxu0 0.0
    %500 = vmatpush1.msra.mxu0 0.0
    %501 = vmatprep.subr.mxu0 0.0
    %502 = vmatpush1.msra.mxu0 0.0
    %503 = vmatprep.subr.mxu0 0.0
    %504 = vmatpush1.msra.mxu0 0.0
    %505 = vmatprep.subr.mxu0 0.0
    %506 = vmatpush1.msra.mxu0 0.0
    %507 = vmatprep.subr.mxu0 0.0
    %508 = vmatpush1.msra.mxu0 0.0
    %509 = vmatprep.subr.mxu0 0.0
    %510 = vmatpush1.msra.mxu0 0.0
    %511 = vmatprep.subr.mxu0 0.0
    %512 = vmatpush1.msra.mxu0 0.0
    %513 = vmatprep.subr.mxu0 0.0
    %514 = vmatpush1.msra.mxu0 0.0
    %515 = vmatprep.subr.mxu0 0.0
    %516 = vmatpush1.msra.mxu0 0.0
    %517 = vmatprep.subr.mxu0 0.0
    %518 = vmatpush1.msra.mxu0 0.0
    %519 = vmatprep.subr.mxu0 0.0
    %520 = vmatpush1.msra.mxu0 0.0
    %521 = vmatprep.subr.mxu0 0.0
    %522 = vmatpush1.msra.mxu0 0.0
    %523 = vmatprep.subr.mxu0 0.0
    %524 = vmatpush1.msra.mxu0 0.0
    %525 = vmatprep.subr.mxu0 0.0
    %526 = vmatpush1.msra.mxu0 0.0
    %527 = vmatprep.subr.mxu0 0.0
    %528 = vmatpush1.msra.mxu0 0.0
    %529 = vmatprep.subr.mxu0 0.0
    %530 = vmatpush1.msra.mxu0 0.0
    %531 = vmatprep.subr.mxu0 0.0
    %532 = vmatpush1.msra.mxu0 0.0
    %533 = vmatprep.subr.mxu0 0.0
    %534 = vmatpush1.msra.mxu0 0.0
    %535 = vmatprep.subr.mxu0 0.0
    %536 = vmatpush1.msra.mxu0 0.0
    %537 = vmatprep.subr.mxu0 0.0
    %538 = vmatpush1.msra.mxu0 0.0
    %539 = vmatprep.subr.mxu0 0.0
    %540 = vmatpush1.msra.mxu0 0.0
    %541 = vmatprep.mubr.f32.mxu0 0.0
    %542 = vmatmul.mubr.f32.gmra.mrb[0].mxu0 %v471
    %v543 = vpop.f32.mrb[0].mxu0
    %v544 = vadd.f32 0.0, %v543
    %v545 = vpop.f32.mrb[0].mxu0
    %546 = vdwg.mxu0
    %v547 = vadd.f32 %v459, %v544
    %v548 = vld [vmem:[%s4] sm:$0xff]
    %v549 = vld [vmem:[%s4 + $0x8] sm:$0xff]
    %v550 = vld [vmem:[%s4 + $0x10] sm:$0xff]
    %v551 = vld [vmem:[%s4 + $0x18] sm:$0xff]
    %v552 = vld [vmem:[%s4 + $0x20] sm:$0xff]
    %v553 = vld [vmem:[%s4 + $0x28] sm:$0xff]
    %v554 = vld [vmem:[%s4 + $0x30] sm:$0xff]
    %v555 = vld [vmem:[%s4 + $0x38] sm:$0xff]
    %v556 = vld [vmem:[%s4 + $0x40] sm:$0xff]
    %v557 = vld [vmem:[%s4 + $0x48] sm:$0xff]
    %v558 = vld [vmem:[%s4 + $0x50] sm:$0xff]
    %v559 = vld [vmem:[%s4 + $0x58] sm:$0xff]
    %v560 = vld [vmem:[%s4 + $0x60] sm:$0xff]
    %v561 = vld [vmem:[%s4 + $0x68] sm:$0xff]
    %v562 = vld [vmem:[%s4 + $0x70] sm:$0xff]
    %v563 = vld [vmem:[%s4 + $0x78] sm:$0xff]
    %v564 = vld [vmem:[%s4 + $0x80] sm:$0xff]
    %v565 = vld [vmem:[%s4 + $0x88] sm:$0xff]
    %v566 = vld [vmem:[%s4 + $0x90] sm:$0xff]
    %v567 = vld [vmem:[%s4 + $0x98] sm:$0xff]
    %v568 = vld [vmem:[%s4 + $0xa0] sm:$0xff]
    %v569 = vld [vmem:[%s4 + $0xa8] sm:$0xff]
    %v570 = vld [vmem:[%s4 + $0xb0] sm:$0xff]
    %v571 = vld [vmem:[%s4 + $0xb8] sm:$0xff]
    %v572 = vld [vmem:[%s4 + $0xc0] sm:$0xff]
    %v573 = vld [vmem:[%s4 + $0xc8] sm:$0xff]
    %v574 = vld [vmem:[%s4 + $0xd0] sm:$0xff]
    %v575 = vld [vmem:[%s4 + $0xd8] sm:$0xff]
    %v576 = vld [vmem:[%s4 + $0xe0] sm:$0xff]
    %v577 = vld [vmem:[%s4 + $0xe8] sm:$0xff]
    %v578 = vld [vmem:[%s4 + $0xf0] sm:$0xff]
    %v579 = vld [vmem:[%s4 + $0xf8] sm:$0xff]
    %v580 = vld [vmem:[%s4 + $0x100] sm:$0xff]
    %v581 = vld [vmem:[%s4 + $0x108] sm:$0xff]
    %v582 = vld [vmem:[%s4 + $0x110] sm:$0xff]
    %v583 = vld [vmem:[%s4 + $0x118] sm:$0xff]
    %v584 = vld [vmem:[%s4 + $0x120] sm:$0xff]
    %v585 = vld [vmem:[%s4 + $0x128] sm:$0xff]
    %v586 = vld [vmem:[%s4 + $0x130] sm:$0xff]
    %v587 = vld [vmem:[%s4 + $0x138] sm:$0xff]
    %v588 = vld [vmem:[%s4 + $0x140] sm:$0xff]
    %v589 = vld [vmem:[%s4 + $0x148] sm:$0xff]
    %v590 = vld [vmem:[%s4 + $0x150] sm:$0xff]
    %v591 = vld [vmem:[%s4 + $0x158] sm:$0xff]
    %v592 = vld [vmem:[%s4 + $0x160] sm:$0xff]
    %v593 = vld [vmem:[%s4 + $0x168] sm:$0xff]
    %v594 = vld [vmem:[%s4 + $0x170] sm:$0xff]
    %v595 = vld [vmem:[%s4 + $0x178] sm:$0xff]
    %v596 = vld [vmem:[%s4 + $0x180] sm:$0xff]
    %v597 = vld [vmem:[%s4 + $0x188] sm:$0xff]
    %v598 = vld [vmem:[%s4 + $0x190] sm:$0xff]
    %v599 = vld [vmem:[%s4 + $0x198] sm:$0xff]
    %v600 = vld [vmem:[%s4 + $0x1a0] sm:$0xff]
    %v601 = vld [vmem:[%s4 + $0x1a8] sm:$0xff]
    %v602 = vld [vmem:[%s4 + $0x1b0] sm:$0xff]
    %v603 = vld [vmem:[%s4 + $0x1b8] sm:$0xff]
    %v604 = vld [vmem:[%s4 + $0x1c0] sm:$0xff]
    %v605 = vld [vmem:[%s4 + $0x1c8] sm:$0xff]
    %v606 = vld [vmem:[%s4 + $0x1d0] sm:$0xff]
    %v607 = vld [vmem:[%s4 + $0x1d8] sm:$0xff]
    %v608 = vld [vmem:[%s4 + $0x1e0] sm:$0xff]
    %v609 = vld [vmem:[%s4 + $0x1e8] sm:$0xff]
    %v610 = vld [vmem:[%s4 + $0x1f0] sm:$0xff]
    %v611 = vld [vmem:[%s4 + $0x1f8] sm:$0xff]
    %v612 = vld [vmem:[%s4 + $0x200] sm:$0xff]
    %v613 = vld [vmem:[%s4 + $0x208] sm:$0xff]
    %v614 = vld [vmem:[%s4 + $0x210] sm:$0xff]
    %v615 = vld [vmem:[%s4 + $0x218] sm:$0xff]
    %v616 = vld [vmem:[%s4 + $0x220] sm:$0xff]
    %v617 = vld [vmem:[%s4 + $0x228] sm:$0xff]
    %v618 = vld [vmem:[%s4 + $0x230] sm:$0xff]
    %v619 = vld [vmem:[%s4 + $0x238] sm:$0xff]
    %v620 = vld [vmem:[%s4 + $0x240] sm:$0xff]
    %v621 = vld [vmem:[%s4 + $0x248] sm:$0xff]
    %v622 = vld [vmem:[%s4 + $0x250] sm:$0xff]
    %v623 = vld [vmem:[%s4 + $0x258] sm:$0xff]
    %v624 = vld [vmem:[%s4 + $0x260] sm:$0xff]
    %v625 = vld [vmem:[%s4 + $0x268] sm:$0xff]
    %v626 = vld [vmem:[%s4 + $0x270] sm:$0xff]
    %v627 = vld [vmem:[%s4 + $0x278] sm:$0xff]
    %v628 = vld [vmem:[%s4 + $0x280] sm:$0xff]
    %v629 = vld [vmem:[%s4 + $0x288] sm:$0xff]
    %v630 = vld [vmem:[%s4 + $0x290] sm:$0xff]
    %v631 = vld [vmem:[%s4 + $0x298] sm:$0xff]
    %v632 = vld [vmem:[%s4 + $0x2a0] sm:$0xff]
    %v633 = vld [vmem:[%s4 + $0x2a8] sm:$0xff]
    %v634 = vld [vmem:[%s4 + $0x2b0] sm:$0xff]
    %v635 = vld [vmem:[%s4 + $0x2b8] sm:$0xff]
    %v636 = vld [vmem:[%s4 + $0x2c0] sm:$0xff]
    %v637 = vld [vmem:[%s4 + $0x2c8] sm:$0xff]
    %v638 = vld [vmem:[%s4 + $0x2d0] sm:$0xff]
    %v639 = vld [vmem:[%s4 + $0x2d8] sm:$0xff]
    %v640 = vld [vmem:[%s4 + $0x2e0] sm:$0xff]
    %v641 = vld [vmem:[%s4 + $0x2e8] sm:$0xff]
    %v642 = vld [vmem:[%s4 + $0x2f0] sm:$0xff]
    %v643 = vld [vmem:[%s4 + $0x2f8] sm:$0xff]
    %v644 = vld [vmem:[%s6 + $0x1] sm:$0x1]
    %v645 = vlaneseq
    %v646 = vshrl.u32 %v645, 7
    %v647 = vsub.s32 0, %v646
    %v648 = vrot.slane %v644, %v647
    %649 = vmatprep.subr.mxu0 0.0
    %650 = vmatpush1.msra.mxu0 %v548
    %651 = vmatprep.subr.mxu0 0.0
    %652 = vmatpush1.msra.mxu0 %v549
    %653 = vmatprep.subr.mxu0 0.0
    %654 = vmatpush1.msra.mxu0 %v550
    %655 = vmatprep.subr.mxu0 0.0
    %656 = vmatpush1.msra.mxu0 %v551
    %657 = vmatprep.subr.mxu0 0.0
    %658 = vmatpush1.msra.mxu0 %v552
    %659 = vmatprep.subr.mxu0 0.0
    %660 = vmatpush1.msra.mxu0 %v553
    %661 = vmatprep.subr.mxu0 0.0
    %662 = vmatpush1.msra.mxu0 %v554
    %663 = vmatprep.subr.mxu0 0.0
    %664 = vmatpush1.msra.mxu0 %v555
    %665 = vmatprep.subr.mxu0 0.0
    %666 = vmatpush1.msra.mxu0 %v556
    %667 = vmatprep.subr.mxu0 0.0
    %668 = vmatpush1.msra.mxu0 %v557
    %669 = vmatprep.subr.mxu0 0.0
    %670 = vmatpush1.msra.mxu0 %v558
    %671 = vmatprep.subr.mxu0 0.0
    %672 = vmatpush1.msra.mxu0 %v559
    %673 = vmatprep.subr.mxu0 0.0
    %674 = vmatpush1.msra.mxu0 %v560
    %675 = vmatprep.subr.mxu0 0.0
    %676 = vmatpush1.msra.mxu0 %v561
    %677 = vmatprep.subr.mxu0 0.0
    %678 = vmatpush1.msra.mxu0 %v562
    %679 = vmatprep.subr.mxu0 0.0
    %680 = vmatpush1.msra.mxu0 %v563
    %681 = vmatprep.subr.mxu0 0.0
    %682 = vmatpush1.msra.mxu0 %v564
    %683 = vmatprep.subr.mxu0 0.0
    %684 = vmatpush1.msra.mxu0 %v565
    %685 = vmatprep.subr.mxu0 0.0
    %686 = vmatpush1.msra.mxu0 %v566
    %687 = vmatprep.subr.mxu0 0.0
    %688 = vmatpush1.msra.mxu0 %v567
    %689 = vmatprep.subr.mxu0 0.0
    %690 = vmatpush1.msra.mxu0 %v568
    %691 = vmatprep.subr.mxu0 0.0
    %692 = vmatpush1.msra.mxu0 %v569
    %693 = vmatprep.subr.mxu0 0.0
    %694 = vmatpush1.msra.mxu0 %v570
    %695 = vmatprep.subr.mxu0 0.0
    %696 = vmatpush1.msra.mxu0 %v571
    %697 = vmatprep.subr.mxu0 0.0
    %698 = vmatpush1.msra.mxu0 %v572
    %699 = vmatprep.subr.mxu0 0.0
    %700 = vmatpush1.msra.mxu0 %v573
    %701 = vmatprep.subr.mxu0 0.0
    %702 = vmatpush1.msra.mxu0 %v574
    %703 = vmatprep.subr.mxu0 0.0
    %704 = vmatpush1.msra.mxu0 %v575
    %705 = vmatprep.subr.mxu0 0.0
    %706 = vmatpush1.msra.mxu0 %v576
    %707 = vmatprep.subr.mxu0 0.0
    %708 = vmatpush1.msra.mxu0 %v577
    %709 = vmatprep.subr.mxu0 0.0
    %710 = vmatpush1.msra.mxu0 %v578
    %711 = vmatprep.subr.mxu0 0.0
    %712 = vmatpush1.msra.mxu0 %v579
    %713 = vmatprep.mubr.f32.mxu0 %v463
    %714 = vmatmul.mubr.f32.gmra.mrb[0].mxu0 %v462
    %v715 = vpop.f32.mrb[0].mxu0
    %v716 = vadd.f32 %v648, %v715
    %v717 = vpop.f32.mrb[0].mxu0
    %718 = vdwg.mxu0
    %719 = vmatprep.subr.mxu0 0.0
    %720 = vmatpush1.msra.mxu0 %v580
    %721 = vmatprep.subr.mxu0 0.0
    %722 = vmatpush1.msra.mxu0 %v581
    %723 = vmatprep.subr.mxu0 0.0
    %724 = vmatpush1.msra.mxu0 %v582
    %725 = vmatprep.subr.mxu0 0.0
    %726 = vmatpush1.msra.mxu0 %v583
    %727 = vmatprep.subr.mxu0 0.0
    %728 = vmatpush1.msra.mxu0 %v584
    %729 = vmatprep.subr.mxu0 0.0
    %730 = vmatpush1.msra.mxu0 %v585
    %731 = vmatprep.subr.mxu0 0.0
    %732 = vmatpush1.msra.mxu0 %v586
    %733 = vmatprep.subr.mxu0 0.0
    %734 = vmatpush1.msra.mxu0 %v587
    %735 = vmatprep.subr.mxu0 0.0
    %736 = vmatpush1.msra.mxu0 %v588
    %737 = vmatprep.subr.mxu0 0.0
    %738 = vmatpush1.msra.mxu0 %v589
    %739 = vmatprep.subr.mxu0 0.0
    %740 = vmatpush1.msra.mxu0 %v590
    %741 = vmatprep.subr.mxu0 0.0
    %742 = vmatpush1.msra.mxu0 %v591
    %743 = vmatprep.subr.mxu0 0.0
    %744 = vmatpush1.msra.mxu0 %v592
    %745 = vmatprep.subr.mxu0 0.0
    %746 = vmatpush1.msra.mxu0 %v593
    %747 = vmatprep.subr.mxu0 0.0
    %748 = vmatpush1.msra.mxu0 %v594
    %749 = vmatprep.subr.mxu0 0.0
    %750 = vmatpush1.msra.mxu0 %v595
    %751 = vmatprep.subr.mxu0 0.0
    %752 = vmatpush1.msra.mxu0 %v596
    %753 = vmatprep.subr.mxu0 0.0
    %754 = vmatpush1.msra.mxu0 %v597
    %755 = vmatprep.subr.mxu0 0.0
    %756 = vmatpush1.msra.mxu0 %v598
    %757 = vmatprep.subr.mxu0 0.0
    %758 = vmatpush1.msra.mxu0 %v599
    %759 = vmatprep.subr.mxu0 0.0
    %760 = vmatpush1.msra.mxu0 %v600
    %761 = vmatprep.subr.mxu0 0.0
    %762 = vmatpush1.msra.mxu0 %v601
    %763 = vmatprep.subr.mxu0 0.0
    %764 = vmatpush1.msra.mxu0 %v602
    %765 = vmatprep.subr.mxu0 0.0
    %766 = vmatpush1.msra.mxu0 %v603
    %767 = vmatprep.subr.mxu0 0.0
    %768 = vmatpush1.msra.mxu0 %v604
    %769 = vmatprep.subr.mxu0 0.0
    %770 = vmatpush1.msra.mxu0 %v605
    %771 = vmatprep.subr.mxu0 0.0
    %772 = vmatpush1.msra.mxu0 %v606
    %773 = vmatprep.subr.mxu0 0.0
    %774 = vmatpush1.msra.mxu0 %v607
    %775 = vmatprep.subr.mxu0 0.0
    %776 = vmatpush1.msra.mxu0 %v608
    %777 = vmatprep.subr.mxu0 0.0
    %778 = vmatpush1.msra.mxu0 %v609
    %779 = vmatprep.subr.mxu0 0.0
    %780 = vmatpush1.msra.mxu0 %v610
    %781 = vmatprep.subr.mxu0 0.0
    %782 = vmatpush1.msra.mxu0 %v611
    %783 = vmatprep.mubr.f32.mxu0 %v465
    %784 = vmatmul.mubr.f32.gmra.mrb[0].mxu0 %v464
    %v785 = vpop.f32.mrb[0].mxu0
    %v786 = vadd.f32 %v716, %v785
    %v787 = vpop.f32.mrb[0].mxu0
    %788 = vdwg.mxu0
    %789 = vmatprep.subr.mxu0 0.0
    %790 = vmatpush1.msra.mxu0 %v612
    %791 = vmatprep.subr.mxu0 0.0
    %792 = vmatpush1.msra.mxu0 %v613
    %793 = vmatprep.subr.mxu0 0.0
    %794 = vmatpush1.msra.mxu0 %v614
    %795 = vmatprep.subr.mxu0 0.0
    %796 = vmatpush1.msra.mxu0 %v615
    %797 = vmatprep.subr.mxu0 0.0
    %798 = vmatpush1.msra.mxu0 %v616
    %799 = vmatprep.subr.mxu0 0.0
    %800 = vmatpush1.msra.mxu0 %v617
    %801 = vmatprep.subr.mxu0 0.0
    %802 = vmatpush1.msra.mxu0 %v618
    %803 = vmatprep.subr.mxu0 0.0
    %804 = vmatpush1.msra.mxu0 %v619
    %805 = vmatprep.subr.mxu0 0.0
    %806 = vmatpush1.msra.mxu0 %v620
    %807 = vmatprep.subr.mxu0 0.0
    %808 = vmatpush1.msra.mxu0 %v621
    %809 = vmatprep.subr.mxu0 0.0
    %810 = vmatpush1.msra.mxu0 %v622
    %811 = vmatprep.subr.mxu0 0.0
    %812 = vmatpush1.msra.mxu0 %v623
    %813 = vmatprep.subr.mxu0 0.0
    %814 = vmatpush1.msra.mxu0 %v624
    %815 = vmatprep.subr.mxu0 0.0
    %816 = vmatpush1.msra.mxu0 %v625
    %817 = vmatprep.subr.mxu0 0.0
    %818 = vmatpush1.msra.mxu0 %v626
    %819 = vmatprep.subr.mxu0 0.0
    %820 = vmatpush1.msra.mxu0 %v627
    %821 = vmatprep.subr.mxu0 0.0
    %822 = vmatpush1.msra.mxu0 %v628
    %823 = vmatprep.subr.mxu0 0.0
    %824 = vmatpush1.msra.mxu0 %v629
    %825 = vmatprep.subr.mxu0 0.0
    %826 = vmatpush1.msra.mxu0 %v630
    %827 = vmatprep.subr.mxu0 0.0
    %828 = vmatpush1.msra.mxu0 %v631
    %829 = vmatprep.subr.mxu0 0.0
    %830 = vmatpush1.msra.mxu0 %v632
    %831 = vmatprep.subr.mxu0 0.0
    %832 = vmatpush1.msra.mxu0 %v633
    %833 = vmatprep.subr.mxu0 0.0
    %834 = vmatpush1.msra.mxu0 %v634
    %835 = vmatprep.subr.mxu0 0.0
    %836 = vmatpush1.msra.mxu0 %v635
    %837 = vmatprep.subr.mxu0 0.0
    %838 = vmatpush1.msra.mxu0 %v636
    %839 = vmatprep.subr.mxu0 0.0
    %840 = vmatpush1.msra.mxu0 %v637
    %841 = vmatprep.subr.mxu0 0.0
    %842 = vmatpush1.msra.mxu0 %v638
    %843 = vmatprep.subr.mxu0 0.0
    %844 = vmatpush1.msra.mxu0 %v639
    %845 = vmatprep.subr.mxu0 0.0
    %846 = vmatpush1.msra.mxu0 %v640
    %847 = vmatprep.subr.mxu0 0.0
    %848 = vmatpush1.msra.mxu0 %v641
    %849 = vmatprep.subr.mxu0 0.0
    %850 = vmatpush1.msra.mxu0 %v642
    %851 = vmatprep.subr.mxu0 0.0
    %852 = vmatpush1.msra.mxu0 %v643
    %853 = vmatprep.mubr.f32.mxu0 %v467
    %854 = vmatmul.mubr.f32.gmra.mrb[0].mxu0 %v466
    %v855 = vpop.f32.mrb[0].mxu0
    %v856 = vadd.f32 %v786, %v855
    %v857 = vpop.f32.mrb[0].mxu0
    %858 = vdwg.mxu0
    %vm859 = vcmp.ge.f32.partialorder %v856, 0.0
    %v860 = vmul.f32 %v856, 0.1
    %v861 = vsel %vm859, %v856, %v860
    %vm862 = vcmask 23552
    %v863 = vsel %vm862, %v861, -inf
    %864 = vmax.xlane.f32.xlu0 %v863
    %v865 = vpop.xlane.xlu0 %864
    %v866 = vsub.f32 %v861, %v865
    %v867 = vmul.f32 %v866, 1.442695
    %v868 = vpow.pop %v867
    %v869 = vsel %vm862, %v868, 0.0
    %870 = vadd.xlane.f32.xlu0 %v869
    %v871 = vpop.xlane.xlu0 %870
    %v872 = vrcp.pop %v871
    %v873 = vmul.f32 %v871, %v872
    %v874 = vsub.f32 2.0, %v873
    %v875 = vmul.f32 %v872, %v874
    %v876 = vmul.f32 %v868, %v875
    %878 = vset.pattern.permute.xlu0 0
    %879 = vperm.xlu0 %878, %v876
    %v880 = vpop.permute.xlu0 %879
    %v882 = vmul.f32 %v880, %v462
    %883 = vset.pattern.permute.xlu0 1
    %884 = vperm.xlu0 %883, %v876
    %v885 = vpop.permute.xlu0 %884
    %v887 = vmul.f32 %v885, %v462
    %889 = vrot.lane.b32.xlu0 %v887, 64
    %v890 = vpop.permute.xlu0 %889
    %v892 = vadd.f32 %v882, %v890
    %893 = vset.pattern.permute.xlu0 2
    %894 = vperm.xlu0 %893, %v876
    %v895 = vpop.permute.xlu0 %894
    %v897 = vmul.f32 %v895, %v463
    %v898 = vadd.f32 %v892, %v897
    %vm899 = vcmask 48152
    %v900 = vsel %vm899, %v861, -inf
    %901 = vmax.xlane.f32.xlu0 %v900
    %v902 = vpop.xlane.xlu0 %901
    %v903 = vsub.f32 %v861, %v902
    %v904 = vmul.f32 %v903, 1.442695
    %v905 = vpow.pop %v904
    %907 = vrot.lane.b32.xlu0 %v905, 125
    %v908 = vpop.permute.xlu0 %907
    %v910 = vsel %vm862, %v908, 0.0
    %911 = vadd.xlane.f32.xlu0 %v910
    %v912 = vpop.xlane.xlu0 %911
    %v913 = vrcp.pop %v912
    %v914 = vmul.f32 %v912, %v913
    %v915 = vsub.f32 2.0, %v914
    %v916 = vmul.f32 %v913, %v915
    %v917 = vmul.f32 %v905, %v916
    %919 = vset.pattern.permute.xlu0 3
    %920 = vperm.xlu0 %919, %v917
    %v921 = vpop.permute.xlu0 %920
    %v923 = vmul.f32 %v921, %v464
    %924 = vset.pattern.permute.xlu0 4
    %925 = vperm.xlu0 %924, %v917
    %v926 = vpop.permute.xlu0 %925
    %v928 = vmul.f32 %v926, %v464
    %930 = vrot.lane.b32.xlu0 %v928, 64
    %v931 = vpop.permute.xlu0 %930
    %v933 = vadd.f32 %v923, %v931
    %934 = vset.pattern.permute.xlu0 5
    %935 = vperm.xlu0 %934, %v917
    %v936 = vpop.permute.xlu0 %935
    %v938 = vmul.f32 %v936, %v465
    %v939 = vadd.f32 %v933, %v938
    %vm940 = vcmask 72752
    %v941 = vsel %vm940, %v861, -inf
    %942 = vmax.xlane.f32.xlu0 %v941
    %v943 = vpop.xlane.xlu0 %942
    %v944 = vsub.f32 %v861, %v943
    %v945 = vmul.f32 %v944, 1.442695
    %v946 = vpow.pop %v945
    %948 = vrot.lane.b32.xlu0 %v946, 122
    %v949 = vpop.permute.xlu0 %948
    %v951 = vsel %vm862, %v949, 0.0
    %952 = vadd.xlane.f32.xlu0 %v951
    %v953 = vpop.xlane.xlu0 %952
    %v954 = vrcp.pop %v953
    %v955 = vmul.f32 %v953, %v954
    %v956 = vsub.f32 2.0, %v955
    %v957 = vmul.f32 %v954, %v956
    %v958 = vmul.f32 %v946, %v957
    %960 = vset.pattern.permute.xlu0 6
    %961 = vperm.xlu0 %960, %v958
    %v962 = vpop.permute.xlu0 %961
    %v964 = vmul.f32 %v962, %v466
    %965 = vset.pattern.permute.xlu0 7
    %966 = vperm.xlu0 %965, %v958
    %v967 = vpop.permute.xlu0 %966
    %v969 = vmul.f32 %v967, %v466
    %971 = vrot.lane.b32.xlu0 %v969, 64
    %v972 = vpop.permute.xlu0 %971
    %v974 = vadd.f32 %v964, %v972
    %975 = vset.pattern.permute.xlu0 8
    %976 = vperm.xlu0 %975, %v958
    %v977 = vpop.permute.xlu0 %976
    %v979 = vmul.f32 %v977, %v467
    %v980 = vadd.f32 %v974, %v979
    %982 = vrot.lane.b32.xlu0 %v939, 64
    %v983 = vpop.permute.xlu0 %982
    %986 = vrot.lane.b32.xlu0 %v547, 64
    %v987 = vpop.permute.xlu0 %986
    %vm989 = vcmask 523264
    %v990 = vsel %vm989, %v898, %v983
    %v991 = vsel %vm989, %v980, %v987
    %v992 = vld [vmem:[#allocation2] sm:$0xff]
    %v993 = vld [vmem:[#allocation2 + $0x8] sm:$0xff]
    %v994 = vld [vmem:[#allocation2 + $0x10] sm:$0xff]
    %v995 = vld [vmem:[#allocation2 + $0x18] sm:$0xff]
    %v996 = vld [vmem:[#allocation2 + $0x20] sm:$0xff]
    %v997 = vld [vmem:[#allocation2 + $0x28] sm:$0xff]
    %v998 = vld [vmem:[#allocation2 + $0x30] sm:$0xff]
    %v999 = vld [vmem:[#allocation2 + $0x38] sm:$0xff]
    %v1000 = vld [vmem:[#allocation2 + $0x40] sm:$0xff]
    %v1001 = vld [vmem:[#allocation2 + $0x48] sm:$0xff]
    %v1002 = vld [vmem:[#allocation2 + $0x50] sm:$0xff]
    %v1003 = vld [vmem:[#allocation2 + $0x58] sm:$0xff]
    %v1004 = vld [vmem:[#allocation2 + $0x60] sm:$0xff]
    %v1005 = vld [vmem:[#allocation2 + $0x68] sm:$0xff]
    %v1006 = vld [vmem:[#allocation2 + $0x70] sm:$0xff]
    %v1007 = vld [vmem:[#allocation2 + $0x78] sm:$0xff]
    %v1008 = vld [vmem:[#allocation2 + $0x80] sm:$0xff]
    %v1009 = vld [vmem:[#allocation2 + $0x88] sm:$0xff]
    %v1010 = vld [vmem:[#allocation2 + $0x90] sm:$0xff]
    %v1011 = vld [vmem:[#allocation2 + $0x98] sm:$0xff]
    %v1012 = vld [vmem:[#allocation2 + $0xa0] sm:$0xff]
    %v1013 = vld [vmem:[#allocation2 + $0xa8] sm:$0xff]
    %v1014 = vld [vmem:[#allocation2 + $0xb0] sm:$0xff]
    %v1015 = vld [vmem:[#allocation2 + $0xb8] sm:$0xff]
    %v1016 = vld [vmem:[#allocation2 + $0xc0] sm:$0xff]
    %v1017 = vld [vmem:[#allocation2 + $0xc8] sm:$0xff]
    %v1018 = vld [vmem:[#allocation2 + $0xd0] sm:$0xff]
    %v1019 = vld [vmem:[#allocation2 + $0xd8] sm:$0xff]
    %v1020 = vld [vmem:[#allocation2 + $0xe0] sm:$0xff]
    %v1021 = vld [vmem:[#allocation2 + $0xe8] sm:$0xff]
    %v1022 = vld [vmem:[#allocation2 + $0xf0] sm:$0xff]
    %v1023 = vld [vmem:[#allocation2 + $0xf8] sm:$0xff]
    %v1024 = vld [vmem:[#allocation2 + $0x100] sm:$0xff]
    %v1025 = vld [vmem:[#allocation2 + $0x108] sm:$0xff]
    %v1026 = vld [vmem:[#allocation2 + $0x110] sm:$0xff]
    %v1027 = vld [vmem:[#allocation2 + $0x118] sm:$0xff]
    %v1028 = vld [vmem:[#allocation2 + $0x120] sm:$0xff]
    %v1029 = vld [vmem:[#allocation2 + $0x128] sm:$0xff]
    %v1030 = vld [vmem:[#allocation2 + $0x130] sm:$0xff]
    %v1031 = vld [vmem:[#allocation2 + $0x138] sm:$0xff]
    %v1032 = vld [vmem:[#allocation2 + $0x140] sm:$0xff]
    %v1033 = vld [vmem:[#allocation2 + $0x148] sm:$0xff]
    %v1034 = vld [vmem:[#allocation2 + $0x150] sm:$0xff]
    %v1035 = vld [vmem:[#allocation2 + $0x158] sm:$0xff]
    %v1036 = vld [vmem:[#allocation2 + $0x160] sm:$0xff]
    %v1037 = vld [vmem:[#allocation2 + $0x168] sm:$0xff]
    %v1038 = vld [vmem:[#allocation2 + $0x170] sm:$0xff]
    %v1039 = vld [vmem:[#allocation2 + $0x178] sm:$0xff]
    %v1040 = vld [vmem:[#allocation2 + $0x180] sm:$0xff]
    %v1041 = vld [vmem:[#allocation2 + $0x188] sm:$0xff]
    %v1042 = vld [vmem:[#allocation2 + $0x190] sm:$0xff]
    %v1043 = vld [vmem:[#allocation2 + $0x198] sm:$0xff]
    %v1044 = vld [vmem:[#allocation2 + $0x1a0] sm:$0xff]
    %v1045 = vld [vmem:[#allocation2 + $0x1a8] sm:$0xff]
    %v1046 = vld [vmem:[#allocation2 + $0x1b0] sm:$0xff]
    %v1047 = vld [vmem:[#allocation2 + $0x1b8] sm:$0xff]
    %v1048 = vld [vmem:[#allocation2 + $0x1c0] sm:$0xff]
    %v1049 = vld [vmem:[#allocation2 + $0x1c8] sm:$0xff]
    %v1050 = vld [vmem:[#allocation2 + $0x1d0] sm:$0xff]
    %v1051 = vld [vmem:[#allocation2 + $0x1d8] sm:$0xff]
    %v1052 = vld [vmem:[#allocation2 + $0x1e0] sm:$0xff]
    %v1053 = vld [vmem:[#allocation2 + $0x1e8] sm:$0xff]
    %v1054 = vld [vmem:[#allocation2 + $0x1f0] sm:$0xff]
    %v1055 = vld [vmem:[#allocation2 + $0x1f8] sm:$0xff]
    %s1056 = scalar_lea.vmem %s6, 2
    %v1057 = vld [vmem:[%s1056] ss:$4 sm:$0x3]
    %v1059 = vlaneseq
    %v1060 = vshrl.u32 %v1059, 7
    %v1061 = vsub.s32 0, %v1060
    %v1062 = vrot.slane %v1057, %v1061
    %v1063 = vlaneseq
    %v1064 = vshrl.u32 %v1063, 7
    %v1065 = vsub.s32 1, %v1064
    %v1066 = vrot.slane %v1057, %v1065
    %1069 = vmatprep.subr.mxu0 %v993
    %1070 = vmatpush1.msra.mxu0 %v992
    %1071 = vmatprep.subr.mxu0 %v995
    %1072 = vmatpush1.msra.mxu0 %v994
    %1073 = vmatprep.subr.mxu0 %v997
    %1074 = vmatpush1.msra.mxu0 %v996
    %1075 = vmatprep.subr.mxu0 %v999
    %1076 = vmatpush1.msra.mxu0 %v998
    %1077 = vmatprep.subr.mxu0 %v1001
    %1078 = vmatpush1.msra.mxu0 %v1000
    %1079 = vmatprep.subr.mxu0 %v1003
    %1080 = vmatpush1.msra.mxu0 %v1002
    %1081 = vmatprep.subr.mxu0 %v1005
    %1082 = vmatpush1.msra.mxu0 %v1004
    %1083 = vmatprep.subr.mxu0 %v1007
    %1084 = vmatpush1.msra.mxu0 %v1006
    %1085 = vmatprep.subr.mxu0 %v1009
    %1086 = vmatpush1.msra.mxu0 %v1008
    %1087 = vmatprep.subr.mxu0 %v1011
    %1088 = vmatpush1.msra.mxu0 %v1010
    %1089 = vmatprep.subr.mxu0 %v1013
    %1090 = vmatpush1.msra.mxu0 %v1012
    %1091 = vmatprep.subr.mxu0 %v1015
    %1092 = vmatpush1.msra.mxu0 %v1014
    %1093 = vmatprep.subr.mxu0 %v1017
    %1094 = vmatpush1.msra.mxu0 %v1016
    %1095 = vmatprep.subr.mxu0 %v1019
    %1096 = vmatpush1.msra.mxu0 %v1018
    %1097 = vmatprep.subr.mxu0 %v1021
    %1098 = vmatpush1.msra.mxu0 %v1020
    %1099 = vmatprep.subr.mxu0 %v1023
    %1100 = vmatpush1.msra.mxu0 %v1022
    %1101 = vmatprep.subr.mxu0 %v1025
    %1102 = vmatpush1.msra.mxu0 %v1024
    %1103 = vmatprep.subr.mxu0 %v1027
    %1104 = vmatpush1.msra.mxu0 %v1026
    %1105 = vmatprep.subr.mxu0 %v1029
    %1106 = vmatpush1.msra.mxu0 %v1028
    %1107 = vmatprep.subr.mxu0 %v1031
    %1108 = vmatpush1.msra.mxu0 %v1030
    %1109 = vmatprep.subr.mxu0 %v1033
    %1110 = vmatpush1.msra.mxu0 %v1032
    %1111 = vmatprep.subr.mxu0 %v1035
    %1112 = vmatpush1.msra.mxu0 %v1034
    %1113 = vmatprep.subr.mxu0 %v1037
    %1114 = vmatpush1.msra.mxu0 %v1036
    %1115 = vmatprep.subr.mxu0 %v1039
    %1116 = vmatpush1.msra.mxu0 %v1038
    %1117 = vmatprep.subr.mxu0 %v1041
    %1118 = vmatpush1.msra.mxu0 %v1040
    %1119 = vmatprep.subr.mxu0 %v1043
    %1120 = vmatpush1.msra.mxu0 %v1042
    %1121 = vmatprep.subr.mxu0 %v1045
    %1122 = vmatpush1.msra.mxu0 %v1044
    %1123 = vmatprep.subr.mxu0 %v1047
    %1124 = vmatpush1.msra.mxu0 %v1046
    %1125 = vmatprep.subr.mxu0 %v1049
    %1126 = vmatpush1.msra.mxu0 %v1048
    %1127 = vmatprep.subr.mxu0 %v1051
    %1128 = vmatpush1.msra.mxu0 %v1050
    %1129 = vmatprep.subr.mxu0 %v1053
    %1130 = vmatpush1.msra.mxu0 %v1052
    %1131 = vmatprep.subr.mxu0 %v1055
    %1132 = vmatpush1.msra.mxu0 %v1054
    %1133 = vmatprep.mubr.f32.mxu0 %v991
    %1134 = vmatmul.mubr.f32.gmra.mrb[0].mxu0 %v990
    %v1135 = vpop.f32.mrb[0].mxu0
    %v1136 = vadd.f32 %v1062, %v1135
    %v1137 = vpop.f32.mrb[0].mxu0
    %v1138 = vadd.f32 %v1066, %v1137
    %1139 = vdwg.mxu0
    %v1140 = vmax.f32 %v1136, 0.0
    %v1141 = vmax.f32 %v1138, 0.0
    %v1142 = vld [vmem:[%s7] sm:$0xff]
    %v1143 = vld [vmem:[%s7 + $0x8] sm:$0xff]
    %v1144 = vld [vmem:[%s7 + $0x10] sm:$0xff]
    %v1145 = vld [vmem:[%s7 + $0x18] sm:$0xff]
    %v1146 = vld [vmem:[%s7 + $0x20] sm:$0xff]
    %v1147 = vld [vmem:[%s7 + $0x28] sm:$0xff]
    %v1148 = vld [vmem:[%s7 + $0x30] sm:$0xff]
    %v1149 = vld [vmem:[%s7 + $0x38] sm:$0xff]
    %v1150 = vld [vmem:[%s7 + $0x40] sm:$0xff]
    %v1151 = vld [vmem:[%s7 + $0x48] sm:$0xff]
    %v1152 = vld [vmem:[%s7 + $0x50] sm:$0xff]
    %v1153 = vld [vmem:[%s7 + $0x58] sm:$0xff]
    %v1154 = vld [vmem:[%s7 + $0x60] sm:$0xff]
    %v1155 = vld [vmem:[%s7 + $0x68] sm:$0xff]
    %v1156 = vld [vmem:[%s7 + $0x70] sm:$0xff]
    %v1157 = vld [vmem:[%s7 + $0x78] sm:$0xff]
    %v1158 = vld [vmem:[%s7 + $0x80] sm:$0xff]
    %v1159 = vld [vmem:[%s7 + $0x88] sm:$0xff]
    %v1160 = vld [vmem:[%s7 + $0x90] sm:$0xff]
    %v1161 = vld [vmem:[%s7 + $0x98] sm:$0xff]
    %v1162 = vld [vmem:[%s7 + $0xa0] sm:$0xff]
    %v1163 = vld [vmem:[%s7 + $0xa8] sm:$0xff]
    %v1164 = vld [vmem:[%s7 + $0xb0] sm:$0xff]
    %v1165 = vld [vmem:[%s7 + $0xb8] sm:$0xff]
    %v1166 = vld [vmem:[%s7 + $0xc0] sm:$0xff]
    %v1167 = vld [vmem:[%s7 + $0xc8] sm:$0xff]
    %v1168 = vld [vmem:[%s7 + $0xd0] sm:$0xff]
    %v1169 = vld [vmem:[%s7 + $0xd8] sm:$0xff]
    %v1170 = vld [vmem:[%s7 + $0xe0] sm:$0xff]
    %v1171 = vld [vmem:[%s7 + $0xe8] sm:$0xff]
    %v1172 = vld [vmem:[%s7 + $0xf0] sm:$0xff]
    %v1173 = vld [vmem:[%s7 + $0xf8] sm:$0xff]
    %v1174 = vld [vmem:[%s6 + $0x3] sm:$0x1]
    %v1175 = vlaneseq
    %v1176 = vshrl.u32 %v1175, 7
    %v1177 = vsub.s32 0, %v1176
    %v1178 = vrot.slane %v1174, %v1177
    %1179 = vmatprep.subr.mxu0 0.0
    %1180 = vmatpush1.msra.mxu0 %v1142
    %1181 = vmatprep.subr.mxu0 0.0
    %1182 = vmatpush1.msra.mxu0 %v1143
    %1183 = vmatprep.subr.mxu0 0.0
    %1184 = vmatpush1.msra.mxu0 %v1144
    %1185 = vmatprep.subr.mxu0 0.0
    %1186 = vmatpush1.msra.mxu0 %v1145
    %1187 = vmatprep.subr.mxu0 0.0
    %1188 = vmatpush1.msra.mxu0 %v1146
    %1189 = vmatprep.subr.mxu0 0.0
    %1190 = vmatpush1.msra.mxu0 %v1147
    %1191 = vmatprep.subr.mxu0 0.0
    %1192 = vmatpush1.msra.mxu0 %v1148
    %1193 = vmatprep.subr.mxu0 0.0
    %1194 = vmatpush1.msra.mxu0 %v1149
    %1195 = vmatprep.subr.mxu0 0.0
    %1196 = vmatpush1.msra.mxu0 %v1150
    %1197 = vmatprep.subr.mxu0 0.0
    %1198 = vmatpush1.msra.mxu0 %v1151
    %1199 = vmatprep.subr.mxu0 0.0
    %1200 = vmatpush1.msra.mxu0 %v1152
    %1201 = vmatprep.subr.mxu0 0.0
    %1202 = vmatpush1.msra.mxu0 %v1153
    %1203 = vmatprep.subr.mxu0 0.0
    %1204 = vmatpush1.msra.mxu0 %v1154
    %1205 = vmatprep.subr.mxu0 0.0
    %1206 = vmatpush1.msra.mxu0 %v1155
    %1207 = vmatprep.subr.mxu0 0.0
    %1208 = vmatpush1.msra.mxu0 %v1156
    %1209 = vmatprep.subr.mxu0 0.0
    %1210 = vmatpush1.msra.mxu0 %v1157
    %1211 = vmatprep.subr.mxu0 0.0
    %1212 = vmatpush1.msra.mxu0 %v1158
    %1213 = vmatprep.subr.mxu0 0.0
    %1214 = vmatpush1.msra.mxu0 %v1159
    %1215 = vmatprep.subr.mxu0 0.0
    %1216 = vmatpush1.msra.mxu0 %v1160
    %1217 = vmatprep.subr.mxu0 0.0
    %1218 = vmatpush1.msra.mxu0 %v1161
    %1219 = vmatprep.subr.mxu0 0.0
    %1220 = vmatpush1.msra.mxu0 %v1162
    %1221 = vmatprep.subr.mxu0 0.0
    %1222 = vmatpush1.msra.mxu0 %v1163
    %1223 = vmatprep.subr.mxu0 0.0
    %1224 = vmatpush1.msra.mxu0 %v1164
    %1225 = vmatprep.subr.mxu0 0.0
    %1226 = vmatpush1.msra.mxu0 %v1165
    %1227 = vmatprep.subr.mxu0 0.0
    %1228 = vmatpush1.msra.mxu0 %v1166
    %1229 = vmatprep.subr.mxu0 0.0
    %1230 = vmatpush1.msra.mxu0 %v1167
    %1231 = vmatprep.subr.mxu0 0.0
    %1232 = vmatpush1.msra.mxu0 %v1168
    %1233 = vmatprep.subr.mxu0 0.0
    %1234 = vmatpush1.msra.mxu0 %v1169
    %1235 = vmatprep.subr.mxu0 0.0
    %1236 = vmatpush1.msra.mxu0 %v1170
    %1237 = vmatprep.subr.mxu0 0.0
    %1238 = vmatpush1.msra.mxu0 %v1171
    %1239 = vmatprep.subr.mxu0 0.0
    %1240 = vmatpush1.msra.mxu0 %v1172
    %1241 = vmatprep.subr.mxu0 0.0
    %1242 = vmatpush1.msra.mxu0 %v1173
    %1243 = vmatprep.mubr.f32.mxu0 %v1141
    %1244 = vmatmul.mubr.f32.gmra.mrb[0].mxu0 %v1140
    %v1245 = vpop.f32.mrb[0].mxu0
    %v1246 = vadd.f32 %v1178, %v1245
    %v1247 = vpop.f32.mrb[0].mxu0
    %1248 = vdwg.mxu0
    %1249 = vst [vmem:[#allocation5] sm:$0xff] %v1246
    // Predicated region
    $region38: #{tpu_custom_call.1} parent=1 // pred_check
      _
    $region39: #{tpu_custom_call.1} parent=1 // pred_check_branch
      %1251 = sbr.rel (0) target = $region41
    $region40: #{tpu_custom_call.1} parent=1 // pred_region
      %s1253 = ssub.s32 128, 128
      %1254 = vsyncadd [#allocation4], %s1253
      %s1256 = sshll.u32 [#allocation5], 4
      %s1257 = int_to_ptr.vmem [resolvable:$true] %s1256
      %1259 = dma.vmem_to_hbm [thread:$0]  %s1257, 128, %s8, [#allocation4]
    $region41: #{tpu_custom_call.1} parent=1 // pred_fallthru
      _
    // Predicated region
    $region42: #{tpu_custom_call.1} parent=1 // pred_check
      _
    $region43: #{tpu_custom_call.1} parent=1 // pred_check_branch
      %1261 = sbr.rel (0) target = $region45
    $region44: #{tpu_custom_call.1} parent=1 // pred_region
      %1262 = dma.done [#allocation4], 128
    $region45: #{tpu_custom_call.1} parent=1 // pred_fallthru
      _
    %1263 = vsyncpa [#allocation3], 1
    %1264 = vsyncpa [#allocation4], 1

</llo_original>
